<compile_context>
chip_gen: v6e
topology: v6e:2x2x1
jax: 0.10.0
libtpu: 0.0.40
codegen_flags: <defaults>
</compile_context>

<pallas_src>
import functools

import jax
import jax.numpy as jnp
from jax.experimental import pallas as pl
from jax.experimental.pallas import tpu as pltpu


_VMEM_LIMIT = 48 * 1024 * 1024  # safe on v7x (64 MiB physical), fine on v5e/v6e


# ----------------------------------------------------------------------------
# Pass 1: conv (K*K tap matmuls, f32 accumulation) + per-image BN partial stats
# ----------------------------------------------------------------------------
def _conv_stats_kernel(x_ref, w_ref, mask_ref, conv_ref, sum_ref, sq_ref,
                       *, K, Wp, HWp):
    """One image per grid step.

    x_ref    : (1, Cin, L)       bf16  flat zero-padded image, L = Hp*Wp + 2p
    w_ref    : (K*K, Cout, Cin)  bf16  per-tap weight matrices
    mask_ref : (1, HWp)          f32   1.0 on valid (non-pad) columns
    conv_ref : (1, Cout, HWp)    bf16  conv output on the padded-width grid
    sum_ref  : (1, Cout, 1)      f32   per-image per-channel sum (valid cols)
    sq_ref   : (1, Cout, 1)      f32   per-image per-channel sum of squares
    """
    cout = w_ref.shape[1]
    acc = jnp.zeros((cout, HWp), jnp.float32)
    for t in range(K * K):                       # static unroll over taps
        kh, kw = divmod(t, K)
        off = kh * Wp + kw                       # static lane offset
        rhs = x_ref[0, :, off:off + HWp]         # (Cin, HWp)
        acc = acc + jnp.dot(w_ref[t], rhs, preferred_element_type=jnp.float32)

    conv_ref[0, :, :] = acc.astype(conv_ref.dtype)

    m = mask_ref[...]                            # (1, HWp), zeros on pad cols
    am = acc * m
    sum_ref[0, :, :] = jnp.sum(am, axis=1, keepdims=True)
    sq_ref[0, :, :] = jnp.sum(acc * am, axis=1, keepdims=True)


# ----------------------------------------------------------------------------
# Pass 2: fused per-channel scale/shift (precomputed BN affine) + ReLU,
#         dropping the padded columns and writing NCHW directly.
# ----------------------------------------------------------------------------
def _bn_relu_kernel(conv_ref, scale_ref, shift_ref, out_ref, *, pad, W):
    x = conv_ref[0, :, :, pad:pad + W].astype(jnp.float32)   # (Cout, H, W)
    y = x * scale_ref[...] + shift_ref[...]
    out_ref[0, :, :, :] = jnp.maximum(y, 0.0)


def vanilla_conv_block(x_nchw, weight_oihw, gamma, beta, eps=1e-5):
    """Forward pass of _VanillaConvBlock.  x_nchw: (N, Cin, H, W) float32."""
    N, Cin, H, W = x_nchw.shape
    Cout, Cin_w, K, K2 = weight_oihw.shape
    assert Cin == Cin_w and K == K2 and K % 2 == 1, "odd kernel expected"
    p = K // 2
    Hp, Wp = H + 2 * p, W + 2 * p
    HWp = H * Wp                     # padded-width output columns per image
    L = Hp * Wp + 2 * p              # flat padded image length (+p halo each end)

    # --- layout-only glue (no im2col): pad, flatten, cast ---------------------
    xb = x_nchw.astype(jnp.bfloat16)
    x_pad = jnp.pad(xb, ((0, 0), (0, 0), (p, p), (p, p)))           # (N,Cin,Hp,Wp)
    xflat = jnp.pad(x_pad.reshape(N, Cin, Hp * Wp), ((0, 0), (0, 0), (p, p)))

    wt = jnp.transpose(weight_oihw, (2, 3, 0, 1)).reshape(K * K, Cout, Cin)
    wt = wt.astype(jnp.bfloat16)

    wpos = jnp.arange(HWp, dtype=jnp.int32) % Wp
    mask = ((wpos >= p) & (wpos < p + W)).astype(jnp.float32).reshape(1, HWp)

    # --- pass 1: conv + per-image BN partial statistics (fully parallel) ------
    conv_wide, psum, psq = pl.pallas_call(
        functools.partial(_conv_stats_kernel, K=K, Wp=Wp, HWp=HWp),
        out_shape=(
            jax.ShapeDtypeStruct((N, Cout, HWp), jnp.bfloat16),
            jax.ShapeDtypeStruct((N, Cout, 1), jnp.float32),
            jax.ShapeDtypeStruct((N, Cout, 1), jnp.float32),
        ),
        grid_spec=pltpu.PrefetchScalarGridSpec(
            num_scalar_prefetch=0,
            grid=(N,),
            in_specs=[
                pl.BlockSpec((1, Cin, L), lambda n: (n, 0, 0)),
                pl.BlockSpec((K * K, Cout, Cin), lambda n: (0, 0, 0)),
                pl.BlockSpec((1, HWp), lambda n: (0, 0)),
            ],
            out_specs=[
                pl.BlockSpec((1, Cout, HWp), lambda n: (n, 0, 0)),
                pl.BlockSpec((1, Cout, 1), lambda n: (n, 0, 0)),
                pl.BlockSpec((1, Cout, 1), lambda n: (n, 0, 0)),
            ]),
        compiler_params=pltpu.CompilerParams(
            dimension_semantics=("parallel",),
            vmem_limit_bytes=_VMEM_LIMIT),
        cost_estimate=pl.CostEstimate(
            flops=N * Cout * HWp * (2 * Cin * K * K + 4),
            transcendentals=0,
            bytes_accessed=(N * Cin * L * 2 + K * K * Cout * Cin * 2
                            + N * Cout * HWp * 2 + 2 * N * Cout * 4 + HWp * 4)),
    )(xflat, wt, mask)

    # --- tiny XLA epilogue: global stats -> per-channel affine ----------------
    count = float(N * H * W)
    tot = jnp.sum(psum, axis=0).reshape(Cout)
    tot2 = jnp.sum(psq, axis=0).reshape(Cout)
    mean = tot / count
    var = jnp.maximum(tot2 / count - mean * mean, 0.0)   # clamp: avoid rsqrt(NaN)
    scale = (gamma.astype(jnp.float32) * jax.lax.rsqrt(var + eps)).reshape(Cout, 1, 1)
    shift = beta.astype(jnp.float32).reshape(Cout, 1, 1) - mean.reshape(Cout, 1, 1) * scale

    conv4 = conv_wide.reshape(N, Cout, H, Wp)   # free (minor-dim split) reshape

    # --- pass 2: normalize + ReLU, direct NCHW output --------------------------
    out = pl.pallas_call(
        functools.partial(_bn_relu_kernel, pad=p, W=W),
        out_shape=jax.ShapeDtypeStruct((N, Cout, H, W), jnp.float32),
        grid_spec=pltpu.PrefetchScalarGridSpec(
            num_scalar_prefetch=0,
            grid=(N,),
            in_specs=[
                pl.BlockSpec((1, Cout, H, Wp), lambda n: (n, 0, 0, 0)),
                pl.BlockSpec((Cout, 1, 1), lambda n: (0, 0, 0)),
                pl.BlockSpec((Cout, 1, 1), lambda n: (0, 0, 0)),
            ],
            out_specs=pl.BlockSpec((1, Cout, H, W), lambda n: (n, 0, 0, 0))),
        compiler_params=pltpu.CompilerParams(
            dimension_semantics=("parallel",),
            vmem_limit_bytes=_VMEM_LIMIT),
        cost_estimate=pl.CostEstimate(
            flops=3 * N * Cout * H * W,
            transcendentals=0,
            bytes_accessed=N * Cout * H * Wp * 2 + N * Cout * H * W * 4
                           + 2 * Cout * 4),
    )(conv4, scale, shift)

    # TODO(synk): BatchNorm2d running_mean/running_var buffer updates are not
    # produced (the forward output does not need them).
    return out


def _reference(x_nchw, weight_oihw, gamma, beta, eps=1e-5):
    """Plain-JAX f32 reference (conv + training-mode BN + ReLU), NCHW."""
    conv = jax.lax.conv_general_dilated(
        x_nchw, weight_oihw, window_strides=(1, 1), padding="SAME",
        dimension_numbers=("NCHW", "OIHW", "NCHW"))
    mean = conv.mean(axis=(0, 2, 3), keepdims=True)
    var = ((conv - mean) ** 2).mean(axis=(0, 2, 3), keepdims=True)
    y = (conv - mean) * jax.lax.rsqrt(var + eps)
    y = y * gamma.reshape(1, -1, 1, 1) + beta.reshape(1, -1, 1, 1)
    return jnp.maximum(y, 0.0)


if __name__ == "__main__":
    # Small deterministic config consistent with the module's __init__.
    N, Cin, Cout, H, W, K = 2, 4, 8, 16, 16, 3

    key = jax.random.PRNGKey(0)
    kx, kw, kg, kb = jax.random.split(key, 4)
    x = jax.random.normal(kx, (N, Cin, H, W), dtype=jnp.float32)
    weight = jax.random.normal(kw, (Cout, Cin, K, K), dtype=jnp.float32) * 0.1
    gamma = 1.0 + 0.1 * jax.random.normal(kg, (Cout,), dtype=jnp.float32)
    beta = 0.1 * jax.random.normal(kb, (Cout,), dtype=jnp.float32)

    out = vanilla_conv_block(x, weight, gamma, beta)
    out = jax.block_until_ready(out)

    ref = _reference(x, weight, gamma, beta)
    assert out.shape == (N, Cout, H, W)
    # bf16 MXU operands + bf16 conv intermediate (f32 accumulation & BN math)
    # -> loosened tolerance vs the f32 reference.
    assert jnp.allclose(out, ref, rtol=3e-2, atol=3e-2), "mismatch vs reference"

    print("KERNEL_OK")
</pallas_src>

<mosaic_0001>
module attributes {stable_mosaic.version = 11 : i64} {
  func.func @_conv_stats_kernel(%arg0: i32, %arg1: memref<1x4x326xbf16, #tpu.memory_space<vmem>>, %arg2: memref<9x8x4xbf16, #tpu.memory_space<vmem>>, %arg3: memref<1x288xf32, #tpu.memory_space<vmem>>, %arg4: memref<1x8x288xbf16, #tpu.memory_space<vmem>>, %arg5: memref<1x8x1xf32, #tpu.memory_space<vmem>>, %arg6: memref<1x8x1xf32, #tpu.memory_space<vmem>>) attributes {dimension_semantics = [#tpu.dimension_semantics<parallel>], iteration_bounds = array<i64: 2>, scalar_prefetch = 0 : i64, scratch_operands = 0 : i64, tpu.core_type = #tpu.core_type<tc>, window_params = [{transform_indices = @transform_0, window_bounds = array<i64: 1, 4, 326>}, {pipeline_mode = #tpu.pipeline_mode<synchronous>, transform_indices = @transform_1, window_bounds = array<i64: 9, 8, 4>}, {pipeline_mode = #tpu.pipeline_mode<synchronous>, transform_indices = @transform_2, window_bounds = array<i64: 1, 288>}, {transform_indices = @transform_3, window_bounds = array<i64: 1, 8, 288>}, {transform_indices = @transform_4, window_bounds = array<i64: 1, 8, 1>}, {transform_indices = @transform_5, window_bounds = array<i64: 1, 8, 1>}]} {
    %cst = arith.constant 0.000000e+00 : f32
    %0 = vector.broadcast %cst : f32 to vector<8x288xf32>
    %c0 = arith.constant 0 : index
    %c0_0 = arith.constant 0 : index
    %c0_1 = arith.constant 0 : index
    %1 = vector.load %arg1[%c0, %c0_0, %c0_1] : memref<1x4x326xbf16, #tpu.memory_space<vmem>>, vector<1x4x288xbf16>
    %2 = vector.shape_cast %1 : vector<1x4x288xbf16> to vector<4x288xbf16>
    %c0_2 = arith.constant 0 : index
    %c0_3 = arith.constant 0 : index
    %c0_4 = arith.constant 0 : index
    %3 = vector.load %arg2[%c0_2, %c0_3, %c0_4] : memref<9x8x4xbf16, #tpu.memory_space<vmem>>, vector<1x8x4xbf16>
    %4 = vector.shape_cast %3 : vector<1x8x4xbf16> to vector<8x4xbf16>
    %cst_5 = arith.constant dense<0.000000e+00> : vector<8x288xf32>
    %5 = tpu.matmul %4, %2, %cst_5 {dimension_numbers = #tpu.dot_dimension_numbers<[1], [0], [0], [1], [0, 0, 1, 1], [], []>} : vector<8x4xbf16>, vector<4x288xbf16>, vector<8x288xf32> -> vector<8x288xf32>
    %6 = arith.addf %0, %5 : vector<8x288xf32>
    %c0_6 = arith.constant 0 : index
    %c0_7 = arith.constant 0 : index
    %c1 = arith.constant 1 : index
    %7 = vector.load %arg1[%c0_6, %c0_7, %c1] : memref<1x4x326xbf16, #tpu.memory_space<vmem>>, vector<1x4x288xbf16>
    %8 = vector.shape_cast %7 : vector<1x4x288xbf16> to vector<4x288xbf16>
    %c1_8 = arith.constant 1 : index
    %c0_9 = arith.constant 0 : index
    %c0_10 = arith.constant 0 : index
    %9 = vector.load %arg2[%c1_8, %c0_9, %c0_10] : memref<9x8x4xbf16, #tpu.memory_space<vmem>>, vector<1x8x4xbf16>
    %10 = vector.shape_cast %9 : vector<1x8x4xbf16> to vector<8x4xbf16>
    %cst_11 = arith.constant dense<0.000000e+00> : vector<8x288xf32>
    %11 = tpu.matmul %10, %8, %cst_11 {dimension_numbers = #tpu.dot_dimension_numbers<[1], [0], [0], [1], [0, 0, 1, 1], [], []>} : vector<8x4xbf16>, vector<4x288xbf16>, vector<8x288xf32> -> vector<8x288xf32>
    %12 = arith.addf %6, %11 : vector<8x288xf32>
    %c0_12 = arith.constant 0 : index
    %c0_13 = arith.constant 0 : index
    %c2 = arith.constant 2 : index
    %13 = vector.load %arg1[%c0_12, %c0_13, %c2] : memref<1x4x326xbf16, #tpu.memory_space<vmem>>, vector<1x4x288xbf16>
    %14 = vector.shape_cast %13 : vector<1x4x288xbf16> to vector<4x288xbf16>
    %c2_14 = arith.constant 2 : index
    %c0_15 = arith.constant 0 : index
    %c0_16 = arith.constant 0 : index
    %15 = vector.load %arg2[%c2_14, %c0_15, %c0_16] : memref<9x8x4xbf16, #tpu.memory_space<vmem>>, vector<1x8x4xbf16>
    %16 = vector.shape_cast %15 : vector<1x8x4xbf16> to vector<8x4xbf16>
    %cst_17 = arith.constant dense<0.000000e+00> : vector<8x288xf32>
    %17 = tpu.matmul %16, %14, %cst_17 {dimension_numbers = #tpu.dot_dimension_numbers<[1], [0], [0], [1], [0, 0, 1, 1], [], []>} : vector<8x4xbf16>, vector<4x288xbf16>, vector<8x288xf32> -> vector<8x288xf32>
    %18 = arith.addf %12, %17 : vector<8x288xf32>
    %c0_18 = arith.constant 0 : index
    %c0_19 = arith.constant 0 : index
    %c18 = arith.constant 18 : index
    %19 = vector.load %arg1[%c0_18, %c0_19, %c18] : memref<1x4x326xbf16, #tpu.memory_space<vmem>>, vector<1x4x288xbf16>
    %20 = vector.shape_cast %19 : vector<1x4x288xbf16> to vector<4x288xbf16>
    %c3 = arith.constant 3 : index
    %c0_20 = arith.constant 0 : index
    %c0_21 = arith.constant 0 : index
    %21 = vector.load %arg2[%c3, %c0_20, %c0_21] : memref<9x8x4xbf16, #tpu.memory_space<vmem>>, vector<1x8x4xbf16>
    %22 = vector.shape_cast %21 : vector<1x8x4xbf16> to vector<8x4xbf16>
    %cst_22 = arith.constant dense<0.000000e+00> : vector<8x288xf32>
    %23 = tpu.matmul %22, %20, %cst_22 {dimension_numbers = #tpu.dot_dimension_numbers<[1], [0], [0], [1], [0, 0, 1, 1], [], []>} : vector<8x4xbf16>, vector<4x288xbf16>, vector<8x288xf32> -> vector<8x288xf32>
    %24 = arith.addf %18, %23 : vector<8x288xf32>
    %c0_23 = arith.constant 0 : index
    %c0_24 = arith.constant 0 : index
    %c19 = arith.constant 19 : index
    %25 = vector.load %arg1[%c0_23, %c0_24, %c19] : memref<1x4x326xbf16, #tpu.memory_space<vmem>>, vector<1x4x288xbf16>
    %26 = vector.shape_cast %25 : vector<1x4x288xbf16> to vector<4x288xbf16>
    %c4 = arith.constant 4 : index
    %c0_25 = arith.constant 0 : index
    %c0_26 = arith.constant 0 : index
    %27 = vector.load %arg2[%c4, %c0_25, %c0_26] : memref<9x8x4xbf16, #tpu.memory_space<vmem>>, vector<1x8x4xbf16>
    %28 = vector.shape_cast %27 : vector<1x8x4xbf16> to vector<8x4xbf16>
    %cst_27 = arith.constant dense<0.000000e+00> : vector<8x288xf32>
    %29 = tpu.matmul %28, %26, %cst_27 {dimension_numbers = #tpu.dot_dimension_numbers<[1], [0], [0], [1], [0, 0, 1, 1], [], []>} : vector<8x4xbf16>, vector<4x288xbf16>, vector<8x288xf32> -> vector<8x288xf32>
    %30 = arith.addf %24, %29 : vector<8x288xf32>
    %c0_28 = arith.constant 0 : index
    %c0_29 = arith.constant 0 : index
    %c20 = arith.constant 20 : index
    %31 = vector.load %arg1[%c0_28, %c0_29, %c20] : memref<1x4x326xbf16, #tpu.memory_space<vmem>>, vector<1x4x288xbf16>
    %32 = vector.shape_cast %31 : vector<1x4x288xbf16> to vector<4x288xbf16>
    %c5 = arith.constant 5 : index
    %c0_30 = arith.constant 0 : index
    %c0_31 = arith.constant 0 : index
    %33 = vector.load %arg2[%c5, %c0_30, %c0_31] : memref<9x8x4xbf16, #tpu.memory_space<vmem>>, vector<1x8x4xbf16>
    %34 = vector.shape_cast %33 : vector<1x8x4xbf16> to vector<8x4xbf16>
    %cst_32 = arith.constant dense<0.000000e+00> : vector<8x288xf32>
    %35 = tpu.matmul %34, %32, %cst_32 {dimension_numbers = #tpu.dot_dimension_numbers<[1], [0], [0], [1], [0, 0, 1, 1], [], []>} : vector<8x4xbf16>, vector<4x288xbf16>, vector<8x288xf32> -> vector<8x288xf32>
    %36 = arith.addf %30, %35 : vector<8x288xf32>
    %c0_33 = arith.constant 0 : index
    %c0_34 = arith.constant 0 : index
    %c36 = arith.constant 36 : index
    %37 = vector.load %arg1[%c0_33, %c0_34, %c36] : memref<1x4x326xbf16, #tpu.memory_space<vmem>>, vector<1x4x288xbf16>
    %38 = vector.shape_cast %37 : vector<1x4x288xbf16> to vector<4x288xbf16>
    %c6 = arith.constant 6 : index
    %c0_35 = arith.constant 0 : index
    %c0_36 = arith.constant 0 : index
    %39 = vector.load %arg2[%c6, %c0_35, %c0_36] : memref<9x8x4xbf16, #tpu.memory_space<vmem>>, vector<1x8x4xbf16>
    %40 = vector.shape_cast %39 : vector<1x8x4xbf16> to vector<8x4xbf16>
    %cst_37 = arith.constant dense<0.000000e+00> : vector<8x288xf32>
    %41 = tpu.matmul %40, %38, %cst_37 {dimension_numbers = #tpu.dot_dimension_numbers<[1], [0], [0], [1], [0, 0, 1, 1], [], []>} : vector<8x4xbf16>, vector<4x288xbf16>, vector<8x288xf32> -> vector<8x288xf32>
    %42 = arith.addf %36, %41 : vector<8x288xf32>
    %c0_38 = arith.constant 0 : index
    %c0_39 = arith.constant 0 : index
    %c37 = arith.constant 37 : index
    %43 = vector.load %arg1[%c0_38, %c0_39, %c37] : memref<1x4x326xbf16, #tpu.memory_space<vmem>>, vector<1x4x288xbf16>
    %44 = vector.shape_cast %43 : vector<1x4x288xbf16> to vector<4x288xbf16>
    %c7 = arith.constant 7 : index
    %c0_40 = arith.constant 0 : index
    %c0_41 = arith.constant 0 : index
    %45 = vector.load %arg2[%c7, %c0_40, %c0_41] : memref<9x8x4xbf16, #tpu.memory_space<vmem>>, vector<1x8x4xbf16>
    %46 = vector.shape_cast %45 : vector<1x8x4xbf16> to vector<8x4xbf16>
    %cst_42 = arith.constant dense<0.000000e+00> : vector<8x288xf32>
    %47 = tpu.matmul %46, %44, %cst_42 {dimension_numbers = #tpu.dot_dimension_numbers<[1], [0], [0], [1], [0, 0, 1, 1], [], []>} : vector<8x4xbf16>, vector<4x288xbf16>, vector<8x288xf32> -> vector<8x288xf32>
    %48 = arith.addf %42, %47 : vector<8x288xf32>
    %c0_43 = arith.constant 0 : index
    %c0_44 = arith.constant 0 : index
    %c38 = arith.constant 38 : index
    %49 = vector.load %arg1[%c0_43, %c0_44, %c38] : memref<1x4x326xbf16, #tpu.memory_space<vmem>>, vector<1x4x288xbf16>
    %50 = vector.shape_cast %49 : vector<1x4x288xbf16> to vector<4x288xbf16>
    %c8 = arith.constant 8 : index
    %c0_45 = arith.constant 0 : index
    %c0_46 = arith.constant 0 : index
    %51 = vector.load %arg2[%c8, %c0_45, %c0_46] : memref<9x8x4xbf16, #tpu.memory_space<vmem>>, vector<1x8x4xbf16>
    %52 = vector.shape_cast %51 : vector<1x8x4xbf16> to vector<8x4xbf16>
    %cst_47 = arith.constant dense<0.000000e+00> : vector<8x288xf32>
    %53 = tpu.matmul %52, %50, %cst_47 {dimension_numbers = #tpu.dot_dimension_numbers<[1], [0], [0], [1], [0, 0, 1, 1], [], []>} : vector<8x4xbf16>, vector<4x288xbf16>, vector<8x288xf32> -> vector<8x288xf32>
    %54 = arith.addf %48, %53 : vector<8x288xf32>
    %55 = arith.truncf %54 : vector<8x288xf32> to vector<8x288xbf16>
    %c0_48 = arith.constant 0 : index
    %c0_49 = arith.constant 0 : index
    %c0_50 = arith.constant 0 : index
    %56 = vector.load %arg4[%c0_48, %c0_49, %c0_50] : memref<1x8x288xbf16, #tpu.memory_space<vmem>>, vector<1x8x288xbf16>
    %57 = vector.shape_cast %56 : vector<1x8x288xbf16> to vector<8x288xbf16>
    %58 = vector.shape_cast %55 : vector<8x288xbf16> to vector<1x8x288xbf16>
    tpu.vector_store %arg4[%c0_48, %c0_49, %c0_50], %58 {strides = array<i32>} : memref<1x8x288xbf16, #tpu.memory_space<vmem>>, vector<1x8x288xbf16>,
    %c0_51 = arith.constant 0 : index
    %c0_52 = arith.constant 0 : index
    %59 = vector.load %arg3[%c0_51, %c0_52] : memref<1x288xf32, #tpu.memory_space<vmem>>, vector<1x288xf32>
    %60 = vector.broadcast %59 : vector<1x288xf32> to vector<8x288xf32>
    %61 = arith.mulf %54, %60 : vector<8x288xf32>
    %cst_53 = arith.constant dense<0.000000e+00> : vector<8xf32>
    %62 = vector.multi_reduction <add>, %61, %cst_53 [1] : vector<8x288xf32> to vector<8xf32>
    %63 = vector.shape_cast %62 : vector<8xf32> to vector<8x1xf32>
    %c0_54 = arith.constant 0 : index
    %c0_55 = arith.constant 0 : index
    %c0_56 = arith.constant 0 : index
    %64 = vector.load %arg5[%c0_54, %c0_55, %c0_56] : memref<1x8x1xf32, #tpu.memory_space<vmem>>, vector<1x8x1xf32>
    %65 = vector.shape_cast %64 : vector<1x8x1xf32> to vector<8x1xf32>
    %66 = vector.shape_cast %63 : vector<8x1xf32> to vector<1x8x1xf32>
    tpu.vector_store %arg5[%c0_54, %c0_55, %c0_56], %66 {strides = array<i32>} : memref<1x8x1xf32, #tpu.memory_space<vmem>>, vector<1x8x1xf32>,
    %67 = arith.mulf %54, %61 : vector<8x288xf32>
    %cst_57 = arith.constant dense<0.000000e+00> : vector<8xf32>
    %68 = vector.multi_reduction <add>, %67, %cst_57 [1] : vector<8x288xf32> to vector<8xf32>
    %69 = vector.shape_cast %68 : vector<8xf32> to vector<8x1xf32>
    %c0_58 = arith.constant 0 : index
    %c0_59 = arith.constant 0 : index
    %c0_60 = arith.constant 0 : index
    %70 = vector.load %arg6[%c0_58, %c0_59, %c0_60] : memref<1x8x1xf32, #tpu.memory_space<vmem>>, vector<1x8x1xf32>
    %71 = vector.shape_cast %70 : vector<1x8x1xf32> to vector<8x1xf32>
    %72 = vector.shape_cast %69 : vector<8x1xf32> to vector<1x8x1xf32>
    tpu.vector_store %arg6[%c0_58, %c0_59, %c0_60], %72 {strides = array<i32>} : memref<1x8x1xf32, #tpu.memory_space<vmem>>, vector<1x8x1xf32>,
    return
  }
  func.func @transform_0(%arg0: i32) -> (i32, i32, i32) {
    %c0_i32 = arith.constant 0 : i32
    %c0_i32_0 = arith.constant 0 : i32
    %c0_i32_1 = arith.constant 0 : i32
    return %arg0, %c0_i32, %c0_i32_0 : i32, i32, i32
  }
  func.func @transform_1(%arg0: i32) -> (i32, i32, i32) {
    %c0_i32 = arith.constant 0 : i32
    %c0_i32_0 = arith.constant 0 : i32
    %c0_i32_1 = arith.constant 0 : i32
    %c0_i32_2 = arith.constant 0 : i32
    return %c0_i32, %c0_i32_0, %c0_i32_1 : i32, i32, i32
  }
  func.func @transform_2(%arg0: i32) -> (i32, i32) {
    %c0_i32 = arith.constant 0 : i32
    %c0_i32_0 = arith.constant 0 : i32
    %c0_i32_1 = arith.constant 0 : i32
    return %c0_i32, %c0_i32_0 : i32, i32
  }
  func.func @transform_3(%arg0: i32) -> (i32, i32, i32) {
    %c0_i32 = arith.constant 0 : i32
    %c0_i32_0 = arith.constant 0 : i32
    %c0_i32_1 = arith.constant 0 : i32
    return %arg0, %c0_i32, %c0_i32_0 : i32, i32, i32
  }
  func.func @transform_4(%arg0: i32) -> (i32, i32, i32) {
    %c0_i32 = arith.constant 0 : i32
    %c0_i32_0 = arith.constant 0 : i32
    %c0_i32_1 = arith.constant 0 : i32
    return %arg0, %c0_i32, %c0_i32_0 : i32, i32, i32
  }
  func.func @transform_5(%arg0: i32) -> (i32, i32, i32) {
    %c0_i32 = arith.constant 0 : i32
    %c0_i32_0 = arith.constant 0 : i32
    %c0_i32_1 = arith.constant 0 : i32
    return %arg0, %c0_i32, %c0_i32_0 : i32, i32, i32
  }
}

</mosaic_0001>

<llo_original>
// kernel: tpu_custom_call.1
$region0: #{tpu_custom_call.1}
  #allocation0 [shape = 'u32[]', space=smem, size = 0x4, offset = 0x4, fixed_abs, tag = 'smem constant byte address 0x4 - core index']
  #allocation1 [shape = 'u32[144,128]{1,0:T(1,128)}', space=vmem, size = 0x12000, scoped, tag = 'internal scratch']
  %s0 = inlined_call_operand.vmem [shape: bf16[2,4,326], index: 0, kind: input, shape index: {}]
  %s1 = inlined_call_operand.vmem [shape: bf16[9,8,4], index: 1, kind: input, shape index: {}]
  %s2 = inlined_call_operand.vmem [shape: f32[1,288], index: 2, kind: input, shape index: {}]
  %s3 = inlined_call_operand.hbm [shape: bf16[2,8,288], index: 3, kind: output, shape index: {0}]
  %s4 = inlined_call_operand.vmem [shape: f32[2,8,1], index: 4, kind: output, shape index: {1}]
  %s5 = inlined_call_operand.vmem [shape: f32[2,8,1], index: 5, kind: output, shape index: {2}]
  %6 = xla_tuple %s3, %s4, %s5
  %s7 = sld [smem:[#allocation0]]
  $region61: #{tpu_custom_call.1} parent=0
    _
  %s9 = ssub.s32 1, %s7
  %s10 = scalar_select 0, %s9, %s7
  $region1: #{tpu_custom_call.1} parent=0
    #allocation2 [shape = 'u8[12288]{0}', space=vmem, size = 0x3000, scoped, tag = 'output window, operand 0']
    #allocation3 [shape = 's32[2]{0}', space=sflag, size = 0x8, scoped, tag = 'scoped memory for tpu_custom_call.1']
    %11 = vsyncpa [#allocation3], 0
    %s12 = scalar_lea.sflag [#allocation3], 1
    %13 = vsyncpa %s12, 0
    loop: start=0, step=1, limit=4
    $region2: #{tpu_custom_call.1} parent=1 // loop_pre_header
      _
    $region3: #{tpu_custom_call.1} parent=1 // loop_header
      %s15 = sphi 0, %s19
      %p16 = scmp.ge.s32.totalorder %s15, 4
      %s25 = sphi 0, %s27
      %s28 = sphi 0, %s25
      %s29 = sphi 0, %s28
      %s45 = sphi 0, %s29
      %s49 = sphi 0, %s49
      %s51 = sphi 0, %s49
      %s52 = sphi 0, %s51
      %s66 = sphi 0, %s52
      %s70 = sphi 0, %s70
      %s72 = sphi 0, %s70
      %s73 = sphi 0, %s72
      %s87 = sphi 0, %s73
      %s93 = sphi 0, %s95
      %s96 = sphi 0, %s93
      %s97 = sphi 0, %s96
      %s113 = sphi 0, %s97
      %s119 = sphi 0, %s121
      %s122 = sphi 0, %s119
      %s123 = sphi 0, %s122
      %s139 = sphi 0, %s123
      %s145 = sphi 0, %s147
      %s148 = sphi 0, %s145
      %s149 = sphi 0, %s148
      %s165 = sphi 0, %s149
    $region4: #{tpu_custom_call.1} parent=1 // loop_header_branch
      %18 = sbr.rel (%p16) target = $region8
    $region5: #{tpu_custom_call.1} parent=1 // loop_body
      %s20 = ssub.s32 %s15, 1
      %s21 = ssub.s32 %s15, 2
      %s22 = sadd.s32 %s15, 1
      %s23 = ssub.s32 %s15, %s22
      %p24 = scmp.eq.s32.totalorder %s23, 0
      %s26 = sadd.s32 %s25, 1
      %s27 = scalar_select %p24, %s25, %s26
      %p30 = pneg %p24
      %p31 = scmp.eq.s32.totalorder %s15, 1
      %p32 = por %p30, %p31
      %p33 = scmp.ne.s32.totalorder %s25, %s28
      %p34 = scmp.eq.s32.totalorder %s15, 0
      %p35 = por %p33, %p34
      %p36 = scmp.ne.s32.totalorder %s25, %s28
      %p37 = scmp.eq.s32.totalorder %s20, 1
      %p38 = por %p36, %p37
      %p39 = scmp.ne.s32.totalorder %s28, %s29
      %p40 = scmp.eq.s32.totalorder %s20, 0
      %p41 = por %p39, %p40
      %p42 = scmp.ne.s32.totalorder %s28, %s29
      %p43 = scmp.eq.s32.totalorder %s21, 1
      %p44 = por %p42, %p43
      %p46 = scmp.ne.s32.totalorder %s29, %s45
      %p47 = scmp.eq.s32.totalorder %s21, 0
      %p48 = por %p46, %p47
      %s50 = sadd.s32 %s49, 1
      %p53 = scmp.eq.s32.totalorder %s15, 1
      %p54 = scmp.ne.s32.totalorder %s49, %s51
      %p55 = scmp.eq.s32.totalorder %s15, 0
      %p56 = por %p54, %p55
      %p57 = scmp.ne.s32.totalorder %s49, %s51
      %p58 = scmp.eq.s32.totalorder %s20, 1
      %p59 = por %p57, %p58
      %p60 = scmp.ne.s32.totalorder %s51, %s52
      %p61 = scmp.eq.s32.totalorder %s20, 0
      %p62 = por %p60, %p61
      %p63 = scmp.ne.s32.totalorder %s51, %s52
      %p64 = scmp.eq.s32.totalorder %s21, 1
      %p65 = por %p63, %p64
      %p67 = scmp.ne.s32.totalorder %s52, %s66
      %p68 = scmp.eq.s32.totalorder %s21, 0
      %p69 = por %p67, %p68
      %s71 = sadd.s32 %s70, 1
      %p74 = scmp.eq.s32.totalorder %s15, 1
      %p75 = scmp.ne.s32.totalorder %s70, %s72
      %p76 = scmp.eq.s32.totalorder %s15, 0
      %p77 = por %p75, %p76
      %p78 = scmp.ne.s32.totalorder %s70, %s72
      %p79 = scmp.eq.s32.totalorder %s20, 1
      %p80 = por %p78, %p79
      %p81 = scmp.ne.s32.totalorder %s72, %s73
      %p82 = scmp.eq.s32.totalorder %s20, 0
      %p83 = por %p81, %p82
      %p84 = scmp.ne.s32.totalorder %s72, %s73
      %p85 = scmp.eq.s32.totalorder %s21, 1
      %p86 = por %p84, %p85
      %p88 = scmp.ne.s32.totalorder %s73, %s87
      %p89 = scmp.eq.s32.totalorder %s21, 0
      %p90 = por %p88, %p89
      %s91 = ssub.s32 %s15, %s22
      %p92 = scmp.eq.s32.totalorder %s91, 0
      %s94 = sadd.s32 %s93, 1
      %s95 = scalar_select %p92, %s93, %s94
      %p98 = pneg %p92
      %p99 = scmp.eq.s32.totalorder %s15, 1
      %p100 = por %p98, %p99
      %p101 = scmp.ne.s32.totalorder %s93, %s96
      %p102 = scmp.eq.s32.totalorder %s15, 0
      %p103 = por %p101, %p102
      %p104 = scmp.ne.s32.totalorder %s93, %s96
      %p105 = scmp.eq.s32.totalorder %s20, 1
      %p106 = por %p104, %p105
      %p107 = scmp.ne.s32.totalorder %s96, %s97
      %p108 = scmp.eq.s32.totalorder %s20, 0
      %p109 = por %p107, %p108
      %p110 = scmp.ne.s32.totalorder %s96, %s97
      %p111 = scmp.eq.s32.totalorder %s21, 1
      %p112 = por %p110, %p111
      %p114 = scmp.ne.s32.totalorder %s97, %s113
      %p115 = scmp.eq.s32.totalorder %s21, 0
      %p116 = por %p114, %p115
      %s117 = ssub.s32 %s15, %s22
      %p118 = scmp.eq.s32.totalorder %s117, 0
      %s120 = sadd.s32 %s119, 1
      %s121 = scalar_select %p118, %s119, %s120
      %p124 = pneg %p118
      %p125 = scmp.eq.s32.totalorder %s15, 1
      %p126 = por %p124, %p125
      %p127 = scmp.ne.s32.totalorder %s119, %s122
      %p128 = scmp.eq.s32.totalorder %s15, 0
      %p129 = por %p127, %p128
      %p130 = scmp.ne.s32.totalorder %s119, %s122
      %p131 = scmp.eq.s32.totalorder %s20, 1
      %p132 = por %p130, %p131
      %p133 = scmp.ne.s32.totalorder %s122, %s123
      %p134 = scmp.eq.s32.totalorder %s20, 0
      %p135 = por %p133, %p134
      %p136 = scmp.ne.s32.totalorder %s122, %s123
      %p137 = scmp.eq.s32.totalorder %s21, 1
      %p138 = por %p136, %p137
      %p140 = scmp.ne.s32.totalorder %s123, %s139
      %p141 = scmp.eq.s32.totalorder %s21, 0
      %p142 = por %p140, %p141
      %s143 = ssub.s32 %s15, %s22
      %p144 = scmp.eq.s32.totalorder %s143, 0
      %s146 = sadd.s32 %s145, 1
      %s147 = scalar_select %p144, %s145, %s146
      %p150 = pneg %p144
      %p151 = scmp.eq.s32.totalorder %s15, 1
      %p152 = por %p150, %p151
      %p153 = scmp.ne.s32.totalorder %s145, %s148
      %p154 = scmp.eq.s32.totalorder %s15, 0
      %p155 = por %p153, %p154
      %p156 = scmp.ne.s32.totalorder %s145, %s148
      %p157 = scmp.eq.s32.totalorder %s20, 1
      %p158 = por %p156, %p157
      %p159 = scmp.ne.s32.totalorder %s148, %s149
      %p160 = scmp.eq.s32.totalorder %s20, 0
      %p161 = por %p159, %p160
      %p162 = scmp.ne.s32.totalorder %s148, %s149
      %p163 = scmp.eq.s32.totalorder %s21, 1
      %p164 = por %p162, %p163
      %p166 = scmp.ne.s32.totalorder %s149, %s165
      %p167 = scmp.eq.s32.totalorder %s21, 0
      %p168 = por %p166, %p167
      %p169 = scmp.le.s32.totalorder 1, %s15
      %p170 = scmp.lt.s32.totalorder %s15, 3
      %p171 = pnand %p169, %p170
      %p172 = pneg %p171
      // Predicated region
      $region9: #{tpu_custom_call.1} parent=5 // pred_check
        _
      $region10: #{tpu_custom_call.1} parent=5 // pred_check_branch
        %174 = sbr.rel (%p171) target = $region12
      $region11: #{tpu_custom_call.1} parent=5 // pred_region
        %s175 = ssub.s32 %s15, 1
        // Predicated region
        $region13: #{tpu_custom_call.1} parent=11 // pred_check
          %p176 = pneg %p62
        $region14: #{tpu_custom_call.1} parent=11 // pred_check_branch
          %178 = sbr.rel (%p176) target = $region16
        $region15: #{tpu_custom_call.1} parent=11 // pred_region
          _
        $region16: #{tpu_custom_call.1} parent=11 // pred_fallthru
          _
        // Predicated region
        $region17: #{tpu_custom_call.1} parent=11 // pred_check
          %p179 = pneg %p83
        $region18: #{tpu_custom_call.1} parent=11 // pred_check_branch
          %181 = sbr.rel (%p179) target = $region20
        $region19: #{tpu_custom_call.1} parent=11 // pred_region
          _
        $region20: #{tpu_custom_call.1} parent=11 // pred_fallthru
          _
      $region12: #{tpu_custom_call.1} parent=5 // pred_fallthru
        _
      %p182 = scmp.lt.s32.totalorder %s15, 2
      // Predicated region
      $region21: #{tpu_custom_call.1} parent=5 // pred_check
        %p183 = pneg %p182
      $region22: #{tpu_custom_call.1} parent=5 // pred_check_branch
        %185 = sbr.rel (%p183) target = $region24
      $region23: #{tpu_custom_call.1} parent=5 // pred_region
        // Predicated region
        $region25: #{tpu_custom_call.1} parent=23 // pred_check
          %p186 = pneg %p35
        $region26: #{tpu_custom_call.1} parent=23 // pred_check_branch
          %188 = sbr.rel (%p186) target = $region28
        $region27: #{tpu_custom_call.1} parent=23 // pred_region
          %p189 = scmp.lt.s32.totalorder %s15, 1
          %s190 = scalar_select %p189, %s15, 1
          %s191 = smul.addr %s190, 3
          %s192 = smul.addr %s191, 2
          %s193 = scalar_lea.vmem %s0, %s192
        $region28: #{tpu_custom_call.1} parent=23 // pred_fallthru
          _
      $region24: #{tpu_custom_call.1} parent=5 // pred_fallthru
        _
      %p194 = scmp.le.s32.totalorder 1, %s15
      %p195 = scmp.lt.s32.totalorder %s15, 3
      %p196 = pnand %p194, %p195
      %p197 = pneg %p196
      // Predicated region
      $region29: #{tpu_custom_call.1} parent=5 // pred_check
        _
      $region30: #{tpu_custom_call.1} parent=5 // pred_check_branch
        %199 = sbr.rel (%p196) target = $region32
      $region31: #{tpu_custom_call.1} parent=5 // pred_region
        %s200 = ssub.s32 %s15, 1
        %p201 = scmp.lt.s32.totalorder %s20, 1
        %s202 = scalar_select %p201, %s20, 1
        %s203 = smul.addr %s202, 3
        %s204 = smul.addr %s203, 2
        %s205 = scalar_lea.vmem %s0, %s204
        %p206 = pneg %p41
        %p207 = pneg %p38
        %p208 = pneg %p62
        %p209 = pneg %p59
        %p210 = pneg %p83
        %p211 = pneg %p80
        %p212 = pneg %p109
        %p213 = pneg %p106
        %s214 = sand.u32 %s96, 1
        %s215 = scalar_lea.sflag [#allocation3], %s214
        %s216 = sand.u32 %s96, 1
        %s217 = smul.addr %s216, 12
        %s218 = scalar_lea.vmem [#allocation2], %s217
        %p219 = pneg %p135
        %p220 = pneg %p132
        %p221 = scmp.lt.s32.totalorder %s20, 1
        %s222 = scalar_select %p221, %s20, 1
        %s223 = smul.addr %s222, 8
        %s224 = scalar_lea.vmem %s4, %s223
        %p225 = pneg %p161
        %p226 = pneg %p158
        %p227 = scmp.lt.s32.totalorder %s20, 1
        %s228 = scalar_select %p227, %s20, 1
        %s229 = smul.addr %s228, 8
        %s230 = scalar_lea.vmem %s5, %s229
        %p231 = scmp.lt.s32.totalorder %s20, 1
        %s232 = scalar_select %p231, %s20, 1
        %s233 = smul.addr %s232, 3
        %s234 = smul.addr %s233, 2
        %s235 = scalar_lea.vmem %s0, %s234
        %p236 = scmp.lt.s32.totalorder %s20, 1
        %s237 = scalar_select %p236, %s20, 1
        %s238 = smul.addr %s237, 8
        %s239 = scalar_lea.vmem %s4, %s238
        %p240 = scmp.lt.s32.totalorder %s20, 1
        %s241 = scalar_select %p240, %s20, 1
        %s242 = smul.addr %s241, 8
        %s243 = scalar_lea.vmem %s5, %s242
        %v245 = vld [vmem:[%s235] sm:$0x3f]
        %v246 = vld [vmem:[%s1] sm:$0xf]
        %s247 = scalar_lea.vmem %s1, 4
        %v248 = vld [vmem:[%s247] sm:$0xf]
        %v250 = vcombine.high %v245, %v245
        %v252 = vunpack.c.l.s4 1983009808
        %v253 = vunpack.c.0.s8 %v252
        %v254 = vlaneseq
        %v255 = vshrl.u32 %v254, 7
        %v256 = vsub.s32 %v253, %v255
        %v257 = vrot.slane %v245, %v256
        %v259 = vunpack.c.l.s4 1983009808
        %v260 = vunpack.c.0.s8 %v259
        %v261 = vlaneseq
        %v262 = vshrl.u32 %v261, 7
        %v263 = vsub.s32 %v260, %v262
        %v264 = vrot.slane %v250, %v263
        %v265 = vcombine.high %v257, %v257
        %266 = vrot.lane.b32.xlu0 %v257, 127
        %v267 = vpop.permute.xlu0 %266
        %268 = vrot.lane.b32.xlu0 %v265, 127
        %v269 = vpop.permute.xlu0 %268
        %270 = vrot.lane.b32.xlu0 %v264, 127
        %v271 = vpop.permute.xlu0 %270
        %vm272 = vcmask 1039360
        %v273 = vsel %vm272, %v267, %v269
        %v274 = vsel %vm272, %v269, %v271
        %vm275 = vcmask 31744
        %v277 = vsel %vm275, %v248, 0
        %vm279 = vcmask 1041408
        %v281 = vsel %vm279, %v273, 0
        %v284 = vsel %vm279, %v274, 0
        %v287 = vsel %vm279, %v271, 0
        %289 = vmatprep.subr.bf16.mxu0 0
        %290 = vmatpush1.bf16.msra.mxu0 0
        %291 = vmatprep.subr.bf16.mxu0 0
        %292 = vmatpush1.bf16.msra.mxu0 0
        %293 = vmatprep.subr.bf16.mxu0 0
        %294 = vmatpush1.bf16.msra.mxu0 0
        %295 = vmatprep.subr.bf16.mxu0 0
        %296 = vmatpush1.bf16.msra.mxu0 0
        %297 = vmatprep.subr.bf16.mxu0 0
        %298 = vmatpush1.bf16.msra.mxu0 0
        %299 = vmatprep.subr.bf16.mxu0 0
        %300 = vmatpush1.bf16.msra.mxu0 0
        %301 = vmatprep.subr.bf16.mxu0 0
        %302 = vmatpush1.bf16.msra.mxu0 0
        %303 = vmatprep.subr.bf16.mxu0 %v284
        %304 = vmatpush1.bf16.msra.mxu0 %v281
        %305 = vmatprep.subr.bf16.mxu0 0
        %306 = vmatpush2.bf16.msra.mxu0 0
        %307 = vmatprep.subr.bf16.mxu0 0
        %308 = vmatpush2.bf16.msra.mxu0 0
        %309 = vmatprep.subr.bf16.mxu0 0
        %310 = vmatpush2.bf16.msra.mxu0 0
        %311 = vmatprep.subr.bf16.mxu0 0
        %312 = vmatpush2.bf16.msra.mxu0 0
        %313 = vmatprep.subr.bf16.mxu0 0
        %314 = vmatpush2.bf16.msra.mxu0 0
        %315 = vmatprep.subr.bf16.mxu0 0
        %316 = vmatpush2.bf16.msra.mxu0 0
        %317 = vmatprep.subr.bf16.mxu0 0
        %318 = vmatpush2.bf16.msra.mxu0 0
        %319 = vmatprep.subr.bf16.mxu0 0
        %320 = vmatpush2.bf16.msra.mxu0 0
        %321 = vmatprep.mubr.bf16.mxu0 0
        %322 = vmatmul.mubr.bf16.gmra.mxu0 %v277
        %v323 = vpop.f32.mrf.mxu0
        %v324 = vadd.f32 0.0, %v323
        %v325 = vpop.f32.mrf.mxu0
        %v326 = vadd.f32 0.0, %v325
        %v327 = vpop.f32.mrf.mxu0
        %v328 = vpop.f32.mrf.mxu0
        %329 = vdwg.mxu0
        %330 = vmatprep.subr.bf16.mxu0 0
        %331 = vmatpush1.bf16.msra.mxu0 0
        %332 = vmatprep.subr.bf16.mxu0 0
        %333 = vmatpush1.bf16.msra.mxu0 0
        %334 = vmatprep.subr.bf16.mxu0 0
        %335 = vmatpush1.bf16.msra.mxu0 0
        %336 = vmatprep.subr.bf16.mxu0 0
        %337 = vmatpush1.bf16.msra.mxu0 0
        %338 = vmatprep.subr.bf16.mxu0 0
        %339 = vmatpush1.bf16.msra.mxu0 0
        %340 = vmatprep.subr.bf16.mxu0 0
        %341 = vmatpush1.bf16.msra.mxu0 0
        %342 = vmatprep.subr.bf16.mxu0 0
        %343 = vmatpush1.bf16.msra.mxu0 0
        %344 = vmatprep.subr.bf16.mxu0 0
        %345 = vmatpush1.bf16.msra.mxu0 %v287
        %346 = vmatprep.subr.bf16.mxu0 0
        %347 = vmatpush2.bf16.msra.mxu0 0
        %348 = vmatprep.subr.bf16.mxu0 0
        %349 = vmatpush2.bf16.msra.mxu0 0
        %350 = vmatprep.subr.bf16.mxu0 0
        %351 = vmatpush2.bf16.msra.mxu0 0
        %352 = vmatprep.subr.bf16.mxu0 0
        %353 = vmatpush2.bf16.msra.mxu0 0
        %354 = vmatprep.subr.bf16.mxu0 0
        %355 = vmatpush2.bf16.msra.mxu0 0
        %356 = vmatprep.subr.bf16.mxu0 0
        %357 = vmatpush2.bf16.msra.mxu0 0
        %358 = vmatprep.subr.bf16.mxu0 0
        %359 = vmatpush2.bf16.msra.mxu0 0
        %360 = vmatprep.subr.bf16.mxu0 0
        %361 = vmatpush2.bf16.msra.mxu0 0
        %362 = vmatprep.mubr.bf16.mxu0 0
        %363 = vmatmul.mubr.bf16.gmra.mxu0 %v277
        %v364 = vpop.f32.mrf.mxu0
        %v365 = vadd.f32 0.0, %v364
        %v366 = vpop.f32.mrf.mxu0
        %v367 = vpop.f32.mrf.mxu0
        %v368 = vpop.f32.mrf.mxu0
        %369 = vdwg.mxu0
        %v371 = vsel %vm275, %v246, 0
        %v374 = vsel %vm279, %v257, 0
        %v377 = vsel %vm279, %v265, 0
        %v380 = vsel %vm279, %v264, 0
        %382 = vmatprep.subr.bf16.mxu0 0
        %383 = vmatpush1.bf16.msra.mxu0 0
        %384 = vmatprep.subr.bf16.mxu0 0
        %385 = vmatpush1.bf16.msra.mxu0 0
        %386 = vmatprep.subr.bf16.mxu0 0
        %387 = vmatpush1.bf16.msra.mxu0 0
        %388 = vmatprep.subr.bf16.mxu0 0
        %389 = vmatpush1.bf16.msra.mxu0 0
        %390 = vmatprep.subr.bf16.mxu0 0
        %391 = vmatpush1.bf16.msra.mxu0 0
        %392 = vmatprep.subr.bf16.mxu0 0
        %393 = vmatpush1.bf16.msra.mxu0 0
        %394 = vmatprep.subr.bf16.mxu0 0
        %395 = vmatpush1.bf16.msra.mxu0 0
        %396 = vmatprep.subr.bf16.mxu0 %v377
        %397 = vmatpush1.bf16.msra.mxu0 %v374
        %398 = vmatprep.subr.bf16.mxu0 0
        %399 = vmatpush2.bf16.msra.mxu0 0
        %400 = vmatprep.subr.bf16.mxu0 0
        %401 = vmatpush2.bf16.msra.mxu0 0
        %402 = vmatprep.subr.bf16.mxu0 0
        %403 = vmatpush2.bf16.msra.mxu0 0
        %404 = vmatprep.subr.bf16.mxu0 0
        %405 = vmatpush2.bf16.msra.mxu0 0
        %406 = vmatprep.subr.bf16.mxu0 0
        %407 = vmatpush2.bf16.msra.mxu0 0
        %408 = vmatprep.subr.bf16.mxu0 0
        %409 = vmatpush2.bf16.msra.mxu0 0
        %410 = vmatprep.subr.bf16.mxu0 0
        %411 = vmatpush2.bf16.msra.mxu0 0
        %412 = vmatprep.subr.bf16.mxu0 0
        %413 = vmatpush2.bf16.msra.mxu0 0
        %414 = vmatprep.mubr.bf16.mxu0 0
        %415 = vmatmul.mubr.bf16.gmra.mxu0 %v371
        %v416 = vpop.f32.mrf.mxu0
        %v417 = vadd.f32 %v324, %v416
        %v418 = vpop.f32.mrf.mxu0
        %v419 = vadd.f32 %v326, %v418
        %v420 = vpop.f32.mrf.mxu0
        %v421 = vpop.f32.mrf.mxu0
        %422 = vdwg.mxu0
        %423 = vmatprep.subr.bf16.mxu0 0
        %424 = vmatpush1.bf16.msra.mxu0 0
        %425 = vmatprep.subr.bf16.mxu0 0
        %426 = vmatpush1.bf16.msra.mxu0 0
        %427 = vmatprep.subr.bf16.mxu0 0
        %428 = vmatpush1.bf16.msra.mxu0 0
        %429 = vmatprep.subr.bf16.mxu0 0
        %430 = vmatpush1.bf16.msra.mxu0 0
        %431 = vmatprep.subr.bf16.mxu0 0
        %432 = vmatpush1.bf16.msra.mxu0 0
        %433 = vmatprep.subr.bf16.mxu0 0
        %434 = vmatpush1.bf16.msra.mxu0 0
        %435 = vmatprep.subr.bf16.mxu0 0
        %436 = vmatpush1.bf16.msra.mxu0 0
        %437 = vmatprep.subr.bf16.mxu0 0
        %438 = vmatpush1.bf16.msra.mxu0 %v380
        %439 = vmatprep.subr.bf16.mxu0 0
        %440 = vmatpush2.bf16.msra.mxu0 0
        %441 = vmatprep.subr.bf16.mxu0 0
        %442 = vmatpush2.bf16.msra.mxu0 0
        %443 = vmatprep.subr.bf16.mxu0 0
        %444 = vmatpush2.bf16.msra.mxu0 0
        %445 = vmatprep.subr.bf16.mxu0 0
        %446 = vmatpush2.bf16.msra.mxu0 0
        %447 = vmatprep.subr.bf16.mxu0 0
        %448 = vmatpush2.bf16.msra.mxu0 0
        %449 = vmatprep.subr.bf16.mxu0 0
        %450 = vmatpush2.bf16.msra.mxu0 0
        %451 = vmatprep.subr.bf16.mxu0 0
        %452 = vmatpush2.bf16.msra.mxu0 0
        %453 = vmatprep.subr.bf16.mxu0 0
        %454 = vmatpush2.bf16.msra.mxu0 0
        %455 = vmatprep.mubr.bf16.mxu0 0
        %456 = vmatmul.mubr.bf16.gmra.mxu0 %v371
        %v457 = vpop.f32.mrf.mxu0
        %v458 = vadd.f32 %v365, %v457
        %v459 = vpop.f32.mrf.mxu0
        %v460 = vpop.f32.mrf.mxu0
        %v461 = vpop.f32.mrf.mxu0
        %462 = vdwg.mxu0
        %v463 = vld [vmem:[%s235] sm:$0x3f]
        %s464 = scalar_lea.vmem %s1, 8
        %v465 = vld [vmem:[%s464] sm:$0xf]
        %v467 = vcombine.high %v463, %v463
        %v469 = vunpack.c.l.s4 1983009808
        %v470 = vunpack.c.0.s8 %v469
        %v471 = vlaneseq
        %v472 = vshrl.u32 %v471, 7
        %v473 = vsub.s32 %v470, %v472
        %v474 = vrot.slane %v463, %v473
        %v476 = vunpack.c.l.s4 1983009808
        %v477 = vunpack.c.0.s8 %v476
        %v478 = vlaneseq
        %v479 = vshrl.u32 %v478, 7
        %v480 = vsub.s32 %v477, %v479
        %v481 = vrot.slane %v467, %v480
        %v482 = vcombine.high %v474, %v474
        %483 = vrot.lane.b32.xlu0 %v474, 126
        %v484 = vpop.permute.xlu0 %483
        %485 = vrot.lane.b32.xlu0 %v482, 126
        %v486 = vpop.permute.xlu0 %485
        %487 = vrot.lane.b32.xlu0 %v481, 126
        %v488 = vpop.permute.xlu0 %487
        %vm489 = vcmask 1031168
        %v490 = vsel %vm489, %v484, %v486
        %v491 = vsel %vm489, %v486, %v488
        %v493 = vsel %vm275, %v465, 0
        %v496 = vsel %vm279, %v490, 0
        %v499 = vsel %vm279, %v491, 0
        %v502 = vsel %vm279, %v488, 0
        %504 = vmatprep.subr.bf16.mxu0 0
        %505 = vmatpush1.bf16.msra.mxu0 0
        %506 = vmatprep.subr.bf16.mxu0 0
        %507 = vmatpush1.bf16.msra.mxu0 0
        %508 = vmatprep.subr.bf16.mxu0 0
        %509 = vmatpush1.bf16.msra.mxu0 0
        %510 = vmatprep.subr.bf16.mxu0 0
        %511 = vmatpush1.bf16.msra.mxu0 0
        %512 = vmatprep.subr.bf16.mxu0 0
        %513 = vmatpush1.bf16.msra.mxu0 0
        %514 = vmatprep.subr.bf16.mxu0 0
        %515 = vmatpush1.bf16.msra.mxu0 0
        %516 = vmatprep.subr.bf16.mxu0 0
        %517 = vmatpush1.bf16.msra.mxu0 0
        %518 = vmatprep.subr.bf16.mxu0 %v499
        %519 = vmatpush1.bf16.msra.mxu0 %v496
        %520 = vmatprep.subr.bf16.mxu0 0
        %521 = vmatpush2.bf16.msra.mxu0 0
        %522 = vmatprep.subr.bf16.mxu0 0
        %523 = vmatpush2.bf16.msra.mxu0 0
        %524 = vmatprep.subr.bf16.mxu0 0
        %525 = vmatpush2.bf16.msra.mxu0 0
        %526 = vmatprep.subr.bf16.mxu0 0
        %527 = vmatpush2.bf16.msra.mxu0 0
        %528 = vmatprep.subr.bf16.mxu0 0
        %529 = vmatpush2.bf16.msra.mxu0 0
        %530 = vmatprep.subr.bf16.mxu0 0
        %531 = vmatpush2.bf16.msra.mxu0 0
        %532 = vmatprep.subr.bf16.mxu0 0
        %533 = vmatpush2.bf16.msra.mxu0 0
        %534 = vmatprep.subr.bf16.mxu0 0
        %535 = vmatpush2.bf16.msra.mxu0 0
        %536 = vmatprep.mubr.bf16.mxu0 0
        %537 = vmatmul.mubr.bf16.gmra.mxu0 %v493
        %v538 = vpop.f32.mrf.mxu0
        %v539 = vadd.f32 0.0, %v538
        %v540 = vpop.f32.mrf.mxu0
        %v541 = vadd.f32 0.0, %v540
        %v542 = vpop.f32.mrf.mxu0
        %v543 = vpop.f32.mrf.mxu0
        %544 = vdwg.mxu0
        %545 = vmatprep.subr.bf16.mxu0 0
        %546 = vmatpush1.bf16.msra.mxu0 0
        %547 = vmatprep.subr.bf16.mxu0 0
        %548 = vmatpush1.bf16.msra.mxu0 0
        %549 = vmatprep.subr.bf16.mxu0 0
        %550 = vmatpush1.bf16.msra.mxu0 0
        %551 = vmatprep.subr.bf16.mxu0 0
        %552 = vmatpush1.bf16.msra.mxu0 0
        %553 = vmatprep.subr.bf16.mxu0 0
        %554 = vmatpush1.bf16.msra.mxu0 0
        %555 = vmatprep.subr.bf16.mxu0 0
        %556 = vmatpush1.bf16.msra.mxu0 0
        %557 = vmatprep.subr.bf16.mxu0 0
        %558 = vmatpush1.bf16.msra.mxu0 0
        %559 = vmatprep.subr.bf16.mxu0 0
        %560 = vmatpush1.bf16.msra.mxu0 %v502
        %561 = vmatprep.subr.bf16.mxu0 0
        %562 = vmatpush2.bf16.msra.mxu0 0
        %563 = vmatprep.subr.bf16.mxu0 0
        %564 = vmatpush2.bf16.msra.mxu0 0
        %565 = vmatprep.subr.bf16.mxu0 0
        %566 = vmatpush2.bf16.msra.mxu0 0
        %567 = vmatprep.subr.bf16.mxu0 0
        %568 = vmatpush2.bf16.msra.mxu0 0
        %569 = vmatprep.subr.bf16.mxu0 0
        %570 = vmatpush2.bf16.msra.mxu0 0
        %571 = vmatprep.subr.bf16.mxu0 0
        %572 = vmatpush2.bf16.msra.mxu0 0
        %573 = vmatprep.subr.bf16.mxu0 0
        %574 = vmatpush2.bf16.msra.mxu0 0
        %575 = vmatprep.subr.bf16.mxu0 0
        %576 = vmatpush2.bf16.msra.mxu0 0
        %577 = vmatprep.mubr.bf16.mxu0 0
        %578 = vmatmul.mubr.bf16.gmra.mxu0 %v493
        %v579 = vpop.f32.mrf.mxu0
        %v580 = vadd.f32 0.0, %v579
        %v581 = vpop.f32.mrf.mxu0
        %v582 = vpop.f32.mrf.mxu0
        %v583 = vpop.f32.mrf.mxu0
        %584 = vdwg.mxu0
        %v585 = vadd.f32 %v417, %v539
        %v586 = vadd.f32 %v419, %v541
        %v587 = vadd.f32 %v458, %v580
        %v588 = vld [vmem:[%s235] sm:$0x3f]
        %s589 = scalar_lea.vmem %s1, 12
        %v590 = vld [vmem:[%s589] sm:$0xf]
        %v592 = vcombine.high %v588, %v588
        %v594 = vunpack.c.l.s4 1983009808
        %v595 = vunpack.c.0.s8 %v594
        %v596 = vlaneseq
        %v597 = vshrl.u32 %v596, 7
        %v598 = vsub.s32 %v595, %v597
        %v599 = vrot.slane %v588, %v598
        %v601 = vunpack.c.l.s4 1983009808
        %v602 = vunpack.c.0.s8 %v601
        %v603 = vlaneseq
        %v604 = vshrl.u32 %v603, 7
        %v605 = vsub.s32 %v602, %v604
        %v606 = vrot.slane %v592, %v605
        %v607 = vcombine.high %v599, %v599
        %608 = vrot.lane.b32.xlu0 %v599, 110
        %v609 = vpop.permute.xlu0 %608
        %610 = vrot.lane.b32.xlu0 %v607, 110
        %v611 = vpop.permute.xlu0 %610
        %612 = vrot.lane.b32.xlu0 %v606, 110
        %v613 = vpop.permute.xlu0 %612
        %vm614 = vcmask 900096
        %v615 = vsel %vm614, %v609, %v611
        %v616 = vsel %vm614, %v611, %v613
        %v618 = vsel %vm275, %v590, 0
        %v621 = vsel %vm279, %v615, 0
        %v624 = vsel %vm279, %v616, 0
        %v627 = vsel %vm279, %v613, 0
        %629 = vmatprep.subr.bf16.mxu0 0
        %630 = vmatpush1.bf16.msra.mxu0 0
        %631 = vmatprep.subr.bf16.mxu0 0
        %632 = vmatpush1.bf16.msra.mxu0 0
        %633 = vmatprep.subr.bf16.mxu0 0
        %634 = vmatpush1.bf16.msra.mxu0 0
        %635 = vmatprep.subr.bf16.mxu0 0
        %636 = vmatpush1.bf16.msra.mxu0 0
        %637 = vmatprep.subr.bf16.mxu0 0
        %638 = vmatpush1.bf16.msra.mxu0 0
        %639 = vmatprep.subr.bf16.mxu0 0
        %640 = vmatpush1.bf16.msra.mxu0 0
        %641 = vmatprep.subr.bf16.mxu0 0
        %642 = vmatpush1.bf16.msra.mxu0 0
        %643 = vmatprep.subr.bf16.mxu0 %v624
        %644 = vmatpush1.bf16.msra.mxu0 %v621
        %645 = vmatprep.subr.bf16.mxu0 0
        %646 = vmatpush2.bf16.msra.mxu0 0
        %647 = vmatprep.subr.bf16.mxu0 0
        %648 = vmatpush2.bf16.msra.mxu0 0
        %649 = vmatprep.subr.bf16.mxu0 0
        %650 = vmatpush2.bf16.msra.mxu0 0
        %651 = vmatprep.subr.bf16.mxu0 0
        %652 = vmatpush2.bf16.msra.mxu0 0
        %653 = vmatprep.subr.bf16.mxu0 0
        %654 = vmatpush2.bf16.msra.mxu0 0
        %655 = vmatprep.subr.bf16.mxu0 0
        %656 = vmatpush2.bf16.msra.mxu0 0
        %657 = vmatprep.subr.bf16.mxu0 0
        %658 = vmatpush2.bf16.msra.mxu0 0
        %659 = vmatprep.subr.bf16.mxu0 0
        %660 = vmatpush2.bf16.msra.mxu0 0
        %661 = vmatprep.mubr.bf16.mxu0 0
        %662 = vmatmul.mubr.bf16.gmra.mxu0 %v618
        %v663 = vpop.f32.mrf.mxu0
        %v664 = vadd.f32 0.0, %v663
        %v665 = vpop.f32.mrf.mxu0
        %v666 = vadd.f32 0.0, %v665
        %v667 = vpop.f32.mrf.mxu0
        %v668 = vpop.f32.mrf.mxu0
        %669 = vdwg.mxu0
        %670 = vmatprep.subr.bf16.mxu0 0
        %671 = vmatpush1.bf16.msra.mxu0 0
        %672 = vmatprep.subr.bf16.mxu0 0
        %673 = vmatpush1.bf16.msra.mxu0 0
        %674 = vmatprep.subr.bf16.mxu0 0
        %675 = vmatpush1.bf16.msra.mxu0 0
        %676 = vmatprep.subr.bf16.mxu0 0
        %677 = vmatpush1.bf16.msra.mxu0 0
        %678 = vmatprep.subr.bf16.mxu0 0
        %679 = vmatpush1.bf16.msra.mxu0 0
        %680 = vmatprep.subr.bf16.mxu0 0
        %681 = vmatpush1.bf16.msra.mxu0 0
        %682 = vmatprep.subr.bf16.mxu0 0
        %683 = vmatpush1.bf16.msra.mxu0 0
        %684 = vmatprep.subr.bf16.mxu0 0
        %685 = vmatpush1.bf16.msra.mxu0 %v627
        %686 = vmatprep.subr.bf16.mxu0 0
        %687 = vmatpush2.bf16.msra.mxu0 0
        %688 = vmatprep.subr.bf16.mxu0 0
        %689 = vmatpush2.bf16.msra.mxu0 0
        %690 = vmatprep.subr.bf16.mxu0 0
        %691 = vmatpush2.bf16.msra.mxu0 0
        %692 = vmatprep.subr.bf16.mxu0 0
        %693 = vmatpush2.bf16.msra.mxu0 0
        %694 = vmatprep.subr.bf16.mxu0 0
        %695 = vmatpush2.bf16.msra.mxu0 0
        %696 = vmatprep.subr.bf16.mxu0 0
        %697 = vmatpush2.bf16.msra.mxu0 0
        %698 = vmatprep.subr.bf16.mxu0 0
        %699 = vmatpush2.bf16.msra.mxu0 0
        %700 = vmatprep.subr.bf16.mxu0 0
        %701 = vmatpush2.bf16.msra.mxu0 0
        %702 = vmatprep.mubr.bf16.mxu0 0
        %703 = vmatmul.mubr.bf16.gmra.mxu0 %v618
        %v704 = vpop.f32.mrf.mxu0
        %v705 = vadd.f32 0.0, %v704
        %v706 = vpop.f32.mrf.mxu0
        %v707 = vpop.f32.mrf.mxu0
        %v708 = vpop.f32.mrf.mxu0
        %709 = vdwg.mxu0
        %v710 = vadd.f32 %v585, %v664
        %v711 = vadd.f32 %v586, %v666
        %v712 = vadd.f32 %v587, %v705
        %v713 = vld [vmem:[%s235] sm:$0x3f]
        %s714 = scalar_lea.vmem %s1, 16
        %v715 = vld [vmem:[%s714] sm:$0xf]
        %v717 = vcombine.high %v713, %v713
        %v719 = vunpack.c.l.s4 1983009808
        %v720 = vunpack.c.0.s8 %v719
        %v721 = vlaneseq
        %v722 = vshrl.u32 %v721, 7
        %v723 = vsub.s32 %v720, %v722
        %v724 = vrot.slane %v713, %v723
        %v726 = vunpack.c.l.s4 1983009808
        %v727 = vunpack.c.0.s8 %v726
        %v728 = vlaneseq
        %v729 = vshrl.u32 %v728, 7
        %v730 = vsub.s32 %v727, %v729
        %v731 = vrot.slane %v717, %v730
        %v732 = vcombine.high %v724, %v724
        %733 = vrot.lane.b32.xlu0 %v724, 109
        %v734 = vpop.permute.xlu0 %733
        %735 = vrot.lane.b32.xlu0 %v732, 109
        %v736 = vpop.permute.xlu0 %735
        %737 = vrot.lane.b32.xlu0 %v731, 109
        %v738 = vpop.permute.xlu0 %737
        %vm739 = vcmask 891904
        %v740 = vsel %vm739, %v734, %v736
        %v741 = vsel %vm739, %v736, %v738
        %v743 = vsel %vm275, %v715, 0
        %v746 = vsel %vm279, %v740, 0
        %v749 = vsel %vm279, %v741, 0
        %v752 = vsel %vm279, %v738, 0
        %754 = vmatprep.subr.bf16.mxu0 0
        %755 = vmatpush1.bf16.msra.mxu0 0
        %756 = vmatprep.subr.bf16.mxu0 0
        %757 = vmatpush1.bf16.msra.mxu0 0
        %758 = vmatprep.subr.bf16.mxu0 0
        %759 = vmatpush1.bf16.msra.mxu0 0
        %760 = vmatprep.subr.bf16.mxu0 0
        %761 = vmatpush1.bf16.msra.mxu0 0
        %762 = vmatprep.subr.bf16.mxu0 0
        %763 = vmatpush1.bf16.msra.mxu0 0
        %764 = vmatprep.subr.bf16.mxu0 0
        %765 = vmatpush1.bf16.msra.mxu0 0
        %766 = vmatprep.subr.bf16.mxu0 0
        %767 = vmatpush1.bf16.msra.mxu0 0
        %768 = vmatprep.subr.bf16.mxu0 %v749
        %769 = vmatpush1.bf16.msra.mxu0 %v746
        %770 = vmatprep.subr.bf16.mxu0 0
        %771 = vmatpush2.bf16.msra.mxu0 0
        %772 = vmatprep.subr.bf16.mxu0 0
        %773 = vmatpush2.bf16.msra.mxu0 0
        %774 = vmatprep.subr.bf16.mxu0 0
        %775 = vmatpush2.bf16.msra.mxu0 0
        %776 = vmatprep.subr.bf16.mxu0 0
        %777 = vmatpush2.bf16.msra.mxu0 0
        %778 = vmatprep.subr.bf16.mxu0 0
        %779 = vmatpush2.bf16.msra.mxu0 0
        %780 = vmatprep.subr.bf16.mxu0 0
        %781 = vmatpush2.bf16.msra.mxu0 0
        %782 = vmatprep.subr.bf16.mxu0 0
        %783 = vmatpush2.bf16.msra.mxu0 0
        %784 = vmatprep.subr.bf16.mxu0 0
        %785 = vmatpush2.bf16.msra.mxu0 0
        %786 = vmatprep.mubr.bf16.mxu0 0
        %787 = vmatmul.mubr.bf16.gmra.mxu0 %v743
        %v788 = vpop.f32.mrf.mxu0
        %v789 = vadd.f32 0.0, %v788
        %v790 = vpop.f32.mrf.mxu0
        %v791 = vadd.f32 0.0, %v790
        %v792 = vpop.f32.mrf.mxu0
        %v793 = vpop.f32.mrf.mxu0
        %794 = vdwg.mxu0
        %795 = vmatprep.subr.bf16.mxu0 0
        %796 = vmatpush1.bf16.msra.mxu0 0
        %797 = vmatprep.subr.bf16.mxu0 0
        %798 = vmatpush1.bf16.msra.mxu0 0
        %799 = vmatprep.subr.bf16.mxu0 0
        %800 = vmatpush1.bf16.msra.mxu0 0
        %801 = vmatprep.subr.bf16.mxu0 0
        %802 = vmatpush1.bf16.msra.mxu0 0
        %803 = vmatprep.subr.bf16.mxu0 0
        %804 = vmatpush1.bf16.msra.mxu0 0
        %805 = vmatprep.subr.bf16.mxu0 0
        %806 = vmatpush1.bf16.msra.mxu0 0
        %807 = vmatprep.subr.bf16.mxu0 0
        %808 = vmatpush1.bf16.msra.mxu0 0
        %809 = vmatprep.subr.bf16.mxu0 0
        %810 = vmatpush1.bf16.msra.mxu0 %v752
        %811 = vmatprep.subr.bf16.mxu0 0
        %812 = vmatpush2.bf16.msra.mxu0 0
        %813 = vmatprep.subr.bf16.mxu0 0
        %814 = vmatpush2.bf16.msra.mxu0 0
        %815 = vmatprep.subr.bf16.mxu0 0
        %816 = vmatpush2.bf16.msra.mxu0 0
        %817 = vmatprep.subr.bf16.mxu0 0
        %818 = vmatpush2.bf16.msra.mxu0 0
        %819 = vmatprep.subr.bf16.mxu0 0
        %820 = vmatpush2.bf16.msra.mxu0 0
        %821 = vmatprep.subr.bf16.mxu0 0
        %822 = vmatpush2.bf16.msra.mxu0 0
        %823 = vmatprep.subr.bf16.mxu0 0
        %824 = vmatpush2.bf16.msra.mxu0 0
        %825 = vmatprep.subr.bf16.mxu0 0
        %826 = vmatpush2.bf16.msra.mxu0 0
        %827 = vmatprep.mubr.bf16.mxu0 0
        %828 = vmatmul.mubr.bf16.gmra.mxu0 %v743
        %v829 = vpop.f32.mrf.mxu0
        %v830 = vadd.f32 0.0, %v829
        %v831 = vpop.f32.mrf.mxu0
        %v832 = vpop.f32.mrf.mxu0
        %v833 = vpop.f32.mrf.mxu0
        %834 = vdwg.mxu0
        %v835 = vadd.f32 %v710, %v789
        %v836 = vadd.f32 %v711, %v791
        %v837 = vadd.f32 %v712, %v830
        %v838 = vld [vmem:[%s235] sm:$0x3f]
        %s839 = scalar_lea.vmem %s1, 20
        %v840 = vld [vmem:[%s839] sm:$0xf]
        %v842 = vcombine.high %v838, %v838
        %v844 = vunpack.c.l.s4 1983009808
        %v845 = vunpack.c.0.s8 %v844
        %v846 = vlaneseq
        %v847 = vshrl.u32 %v846, 7
        %v848 = vsub.s32 %v845, %v847
        %v849 = vrot.slane %v838, %v848
        %v851 = vunpack.c.l.s4 1983009808
        %v852 = vunpack.c.0.s8 %v851
        %v853 = vlaneseq
        %v854 = vshrl.u32 %v853, 7
        %v855 = vsub.s32 %v852, %v854
        %v856 = vrot.slane %v842, %v855
        %v857 = vcombine.high %v849, %v849
        %858 = vrot.lane.b32.xlu0 %v849, 108
        %v859 = vpop.permute.xlu0 %858
        %860 = vrot.lane.b32.xlu0 %v857, 108
        %v861 = vpop.permute.xlu0 %860
        %862 = vrot.lane.b32.xlu0 %v856, 108
        %v863 = vpop.permute.xlu0 %862
        %vm864 = vcmask 883712
        %v865 = vsel %vm864, %v859, %v861
        %v866 = vsel %vm864, %v861, %v863
        %v868 = vsel %vm275, %v840, 0
        %v871 = vsel %vm279, %v865, 0
        %v874 = vsel %vm279, %v866, 0
        %v877 = vsel %vm279, %v863, 0
        %879 = vmatprep.subr.bf16.mxu0 0
        %880 = vmatpush1.bf16.msra.mxu0 0
        %881 = vmatprep.subr.bf16.mxu0 0
        %882 = vmatpush1.bf16.msra.mxu0 0
        %883 = vmatprep.subr.bf16.mxu0 0
        %884 = vmatpush1.bf16.msra.mxu0 0
        %885 = vmatprep.subr.bf16.mxu0 0
        %886 = vmatpush1.bf16.msra.mxu0 0
        %887 = vmatprep.subr.bf16.mxu0 0
        %888 = vmatpush1.bf16.msra.mxu0 0
        %889 = vmatprep.subr.bf16.mxu0 0
        %890 = vmatpush1.bf16.msra.mxu0 0
        %891 = vmatprep.subr.bf16.mxu0 0
        %892 = vmatpush1.bf16.msra.mxu0 0
        %893 = vmatprep.subr.bf16.mxu0 %v874
        %894 = vmatpush1.bf16.msra.mxu0 %v871
        %895 = vmatprep.subr.bf16.mxu0 0
        %896 = vmatpush2.bf16.msra.mxu0 0
        %897 = vmatprep.subr.bf16.mxu0 0
        %898 = vmatpush2.bf16.msra.mxu0 0
        %899 = vmatprep.subr.bf16.mxu0 0
        %900 = vmatpush2.bf16.msra.mxu0 0
        %901 = vmatprep.subr.bf16.mxu0 0
        %902 = vmatpush2.bf16.msra.mxu0 0
        %903 = vmatprep.subr.bf16.mxu0 0
        %904 = vmatpush2.bf16.msra.mxu0 0
        %905 = vmatprep.subr.bf16.mxu0 0
        %906 = vmatpush2.bf16.msra.mxu0 0
        %907 = vmatprep.subr.bf16.mxu0 0
        %908 = vmatpush2.bf16.msra.mxu0 0
        %909 = vmatprep.subr.bf16.mxu0 0
        %910 = vmatpush2.bf16.msra.mxu0 0
        %911 = vmatprep.mubr.bf16.mxu0 0
        %912 = vmatmul.mubr.bf16.gmra.mxu0 %v868
        %v913 = vpop.f32.mrf.mxu0
        %v914 = vadd.f32 0.0, %v913
        %v915 = vpop.f32.mrf.mxu0
        %v916 = vadd.f32 0.0, %v915
        %v917 = vpop.f32.mrf.mxu0
        %v918 = vpop.f32.mrf.mxu0
        %919 = vdwg.mxu0
        %920 = vmatprep.subr.bf16.mxu0 0
        %921 = vmatpush1.bf16.msra.mxu0 0
        %922 = vmatprep.subr.bf16.mxu0 0
        %923 = vmatpush1.bf16.msra.mxu0 0
        %924 = vmatprep.subr.bf16.mxu0 0
        %925 = vmatpush1.bf16.msra.mxu0 0
        %926 = vmatprep.subr.bf16.mxu0 0
        %927 = vmatpush1.bf16.msra.mxu0 0
        %928 = vmatprep.subr.bf16.mxu0 0
        %929 = vmatpush1.bf16.msra.mxu0 0
        %930 = vmatprep.subr.bf16.mxu0 0
        %931 = vmatpush1.bf16.msra.mxu0 0
        %932 = vmatprep.subr.bf16.mxu0 0
        %933 = vmatpush1.bf16.msra.mxu0 0
        %934 = vmatprep.subr.bf16.mxu0 0
        %935 = vmatpush1.bf16.msra.mxu0 %v877
        %936 = vmatprep.subr.bf16.mxu0 0
        %937 = vmatpush2.bf16.msra.mxu0 0
        %938 = vmatprep.subr.bf16.mxu0 0
        %939 = vmatpush2.bf16.msra.mxu0 0
        %940 = vmatprep.subr.bf16.mxu0 0
        %941 = vmatpush2.bf16.msra.mxu0 0
        %942 = vmatprep.subr.bf16.mxu0 0
        %943 = vmatpush2.bf16.msra.mxu0 0
        %944 = vmatprep.subr.bf16.mxu0 0
        %945 = vmatpush2.bf16.msra.mxu0 0
        %946 = vmatprep.subr.bf16.mxu0 0
        %947 = vmatpush2.bf16.msra.mxu0 0
        %948 = vmatprep.subr.bf16.mxu0 0
        %949 = vmatpush2.bf16.msra.mxu0 0
        %950 = vmatprep.subr.bf16.mxu0 0
        %951 = vmatpush2.bf16.msra.mxu0 0
        %952 = vmatprep.mubr.bf16.mxu0 0
        %953 = vmatmul.mubr.bf16.gmra.mxu0 %v868
        %v954 = vpop.f32.mrf.mxu0
        %v955 = vadd.f32 0.0, %v954
        %v956 = vpop.f32.mrf.mxu0
        %v957 = vpop.f32.mrf.mxu0
        %v958 = vpop.f32.mrf.mxu0
        %959 = vdwg.mxu0
        %v960 = vadd.f32 %v835, %v914
        %v961 = vadd.f32 %v836, %v916
        %v962 = vadd.f32 %v837, %v955
        %v963 = vld [vmem:[%s235] sm:$0x3f]
        %s964 = scalar_lea.vmem %s1, 24
        %v965 = vld [vmem:[%s964] sm:$0xf]
        %v967 = vcombine.high %v963, %v963
        %v969 = vunpack.c.l.s4 1983009808
        %v970 = vunpack.c.0.s8 %v969
        %v971 = vlaneseq
        %v972 = vshrl.u32 %v971, 7
        %v973 = vsub.s32 %v970, %v972
        %v974 = vrot.slane %v963, %v973
        %v976 = vunpack.c.l.s4 1983009808
        %v977 = vunpack.c.0.s8 %v976
        %v978 = vlaneseq
        %v979 = vshrl.u32 %v978, 7
        %v980 = vsub.s32 %v977, %v979
        %v981 = vrot.slane %v967, %v980
        %v982 = vcombine.high %v974, %v974
        %983 = vrot.lane.b32.xlu0 %v974, 92
        %v984 = vpop.permute.xlu0 %983
        %985 = vrot.lane.b32.xlu0 %v982, 92
        %v986 = vpop.permute.xlu0 %985
        %987 = vrot.lane.b32.xlu0 %v981, 92
        %v988 = vpop.permute.xlu0 %987
        %vm989 = vcmask 752640
        %v990 = vsel %vm989, %v984, %v986
        %v991 = vsel %vm989, %v986, %v988
        %v993 = vsel %vm275, %v965, 0
        %v996 = vsel %vm279, %v990, 0
        %v999 = vsel %vm279, %v991, 0
        %v1002 = vsel %vm279, %v988, 0
        %1004 = vmatprep.subr.bf16.mxu0 0
        %1005 = vmatpush1.bf16.msra.mxu0 0
        %1006 = vmatprep.subr.bf16.mxu0 0
        %1007 = vmatpush1.bf16.msra.mxu0 0
        %1008 = vmatprep.subr.bf16.mxu0 0
        %1009 = vmatpush1.bf16.msra.mxu0 0
        %1010 = vmatprep.subr.bf16.mxu0 0
        %1011 = vmatpush1.bf16.msra.mxu0 0
        %1012 = vmatprep.subr.bf16.mxu0 0
        %1013 = vmatpush1.bf16.msra.mxu0 0
        %1014 = vmatprep.subr.bf16.mxu0 0
        %1015 = vmatpush1.bf16.msra.mxu0 0
        %1016 = vmatprep.subr.bf16.mxu0 0
        %1017 = vmatpush1.bf16.msra.mxu0 0
        %1018 = vmatprep.subr.bf16.mxu0 %v999
        %1019 = vmatpush1.bf16.msra.mxu0 %v996
        %1020 = vmatprep.subr.bf16.mxu0 0
        %1021 = vmatpush2.bf16.msra.mxu0 0
        %1022 = vmatprep.subr.bf16.mxu0 0
        %1023 = vmatpush2.bf16.msra.mxu0 0
        %1024 = vmatprep.subr.bf16.mxu0 0
        %1025 = vmatpush2.bf16.msra.mxu0 0
        %1026 = vmatprep.subr.bf16.mxu0 0
        %1027 = vmatpush2.bf16.msra.mxu0 0
        %1028 = vmatprep.subr.bf16.mxu0 0
        %1029 = vmatpush2.bf16.msra.mxu0 0
        %1030 = vmatprep.subr.bf16.mxu0 0
        %1031 = vmatpush2.bf16.msra.mxu0 0
        %1032 = vmatprep.subr.bf16.mxu0 0
        %1033 = vmatpush2.bf16.msra.mxu0 0
        %1034 = vmatprep.subr.bf16.mxu0 0
        %1035 = vmatpush2.bf16.msra.mxu0 0
        %1036 = vmatprep.mubr.bf16.mxu0 0
        %1037 = vmatmul.mubr.bf16.gmra.mxu0 %v993
        %v1038 = vpop.f32.mrf.mxu0
        %v1039 = vadd.f32 0.0, %v1038
        %v1040 = vpop.f32.mrf.mxu0
        %v1041 = vadd.f32 0.0, %v1040
        %v1042 = vpop.f32.mrf.mxu0
        %v1043 = vpop.f32.mrf.mxu0
        %1044 = vdwg.mxu0
        %1045 = vmatprep.subr.bf16.mxu0 0
        %1046 = vmatpush1.bf16.msra.mxu0 0
        %1047 = vmatprep.subr.bf16.mxu0 0
        %1048 = vmatpush1.bf16.msra.mxu0 0
        %1049 = vmatprep.subr.bf16.mxu0 0
        %1050 = vmatpush1.bf16.msra.mxu0 0
        %1051 = vmatprep.subr.bf16.mxu0 0
        %1052 = vmatpush1.bf16.msra.mxu0 0
        %1053 = vmatprep.subr.bf16.mxu0 0
        %1054 = vmatpush1.bf16.msra.mxu0 0
        %1055 = vmatprep.subr.bf16.mxu0 0
        %1056 = vmatpush1.bf16.msra.mxu0 0
        %1057 = vmatprep.subr.bf16.mxu0 0
        %1058 = vmatpush1.bf16.msra.mxu0 0
        %1059 = vmatprep.subr.bf16.mxu0 0
        %1060 = vmatpush1.bf16.msra.mxu0 %v1002
        %1061 = vmatprep.subr.bf16.mxu0 0
        %1062 = vmatpush2.bf16.msra.mxu0 0
        %1063 = vmatprep.subr.bf16.mxu0 0
        %1064 = vmatpush2.bf16.msra.mxu0 0
        %1065 = vmatprep.subr.bf16.mxu0 0
        %1066 = vmatpush2.bf16.msra.mxu0 0
        %1067 = vmatprep.subr.bf16.mxu0 0
        %1068 = vmatpush2.bf16.msra.mxu0 0
        %1069 = vmatprep.subr.bf16.mxu0 0
        %1070 = vmatpush2.bf16.msra.mxu0 0
        %1071 = vmatprep.subr.bf16.mxu0 0
        %1072 = vmatpush2.bf16.msra.mxu0 0
        %1073 = vmatprep.subr.bf16.mxu0 0
        %1074 = vmatpush2.bf16.msra.mxu0 0
        %1075 = vmatprep.subr.bf16.mxu0 0
        %1076 = vmatpush2.bf16.msra.mxu0 0
        %1077 = vmatprep.mubr.bf16.mxu0 0
        %1078 = vmatmul.mubr.bf16.gmra.mxu0 %v993
        %v1079 = vpop.f32.mrf.mxu0
        %v1080 = vadd.f32 0.0, %v1079
        %v1081 = vpop.f32.mrf.mxu0
        %v1082 = vpop.f32.mrf.mxu0
        %v1083 = vpop.f32.mrf.mxu0
        %1084 = vdwg.mxu0
        %v1085 = vadd.f32 %v960, %v1039
        %v1086 = vadd.f32 %v961, %v1041
        %v1087 = vadd.f32 %v962, %v1080
        %v1088 = vld [vmem:[%s235] sm:$0x3f]
        %s1089 = scalar_lea.vmem %s1, 28
        %v1090 = vld [vmem:[%s1089] sm:$0xf]
        %v1092 = vcombine.high %v1088, %v1088
        %v1094 = vunpack.c.l.s4 1983009808
        %v1095 = vunpack.c.0.s8 %v1094
        %v1096 = vlaneseq
        %v1097 = vshrl.u32 %v1096, 7
        %v1098 = vsub.s32 %v1095, %v1097
        %v1099 = vrot.slane %v1088, %v1098
        %v1101 = vunpack.c.l.s4 1983009808
        %v1102 = vunpack.c.0.s8 %v1101
        %v1103 = vlaneseq
        %v1104 = vshrl.u32 %v1103, 7
        %v1105 = vsub.s32 %v1102, %v1104
        %v1106 = vrot.slane %v1092, %v1105
        %v1107 = vcombine.high %v1099, %v1099
        %1108 = vrot.lane.b32.xlu0 %v1099, 91
        %v1109 = vpop.permute.xlu0 %1108
        %1110 = vrot.lane.b32.xlu0 %v1107, 91
        %v1111 = vpop.permute.xlu0 %1110
        %1112 = vrot.lane.b32.xlu0 %v1106, 91
        %v1113 = vpop.permute.xlu0 %1112
        %vm1114 = vcmask 744448
        %v1115 = vsel %vm1114, %v1109, %v1111
        %v1116 = vsel %vm1114, %v1111, %v1113
        %v1118 = vsel %vm275, %v1090, 0
        %v1121 = vsel %vm279, %v1115, 0
        %v1124 = vsel %vm279, %v1116, 0
        %v1127 = vsel %vm279, %v1113, 0
        %1129 = vmatprep.subr.bf16.mxu0 0
        %1130 = vmatpush1.bf16.msra.mxu0 0
        %1131 = vmatprep.subr.bf16.mxu0 0
        %1132 = vmatpush1.bf16.msra.mxu0 0
        %1133 = vmatprep.subr.bf16.mxu0 0
        %1134 = vmatpush1.bf16.msra.mxu0 0
        %1135 = vmatprep.subr.bf16.mxu0 0
        %1136 = vmatpush1.bf16.msra.mxu0 0
        %1137 = vmatprep.subr.bf16.mxu0 0
        %1138 = vmatpush1.bf16.msra.mxu0 0
        %1139 = vmatprep.subr.bf16.mxu0 0
        %1140 = vmatpush1.bf16.msra.mxu0 0
        %1141 = vmatprep.subr.bf16.mxu0 0
        %1142 = vmatpush1.bf16.msra.mxu0 0
        %1143 = vmatprep.subr.bf16.mxu0 %v1124
        %1144 = vmatpush1.bf16.msra.mxu0 %v1121
        %1145 = vmatprep.subr.bf16.mxu0 0
        %1146 = vmatpush2.bf16.msra.mxu0 0
        %1147 = vmatprep.subr.bf16.mxu0 0
        %1148 = vmatpush2.bf16.msra.mxu0 0
        %1149 = vmatprep.subr.bf16.mxu0 0
        %1150 = vmatpush2.bf16.msra.mxu0 0
        %1151 = vmatprep.subr.bf16.mxu0 0
        %1152 = vmatpush2.bf16.msra.mxu0 0
        %1153 = vmatprep.subr.bf16.mxu0 0
        %1154 = vmatpush2.bf16.msra.mxu0 0
        %1155 = vmatprep.subr.bf16.mxu0 0
        %1156 = vmatpush2.bf16.msra.mxu0 0
        %1157 = vmatprep.subr.bf16.mxu0 0
        %1158 = vmatpush2.bf16.msra.mxu0 0
        %1159 = vmatprep.subr.bf16.mxu0 0
        %1160 = vmatpush2.bf16.msra.mxu0 0
        %1161 = vmatprep.mubr.bf16.mxu0 0
        %1162 = vmatmul.mubr.bf16.gmra.mxu0 %v1118
        %v1163 = vpop.f32.mrf.mxu0
        %v1164 = vadd.f32 0.0, %v1163
        %v1165 = vpop.f32.mrf.mxu0
        %v1166 = vadd.f32 0.0, %v1165
        %v1167 = vpop.f32.mrf.mxu0
        %v1168 = vpop.f32.mrf.mxu0
        %1169 = vdwg.mxu0
        %1170 = vmatprep.subr.bf16.mxu0 0
        %1171 = vmatpush1.bf16.msra.mxu0 0
        %1172 = vmatprep.subr.bf16.mxu0 0
        %1173 = vmatpush1.bf16.msra.mxu0 0
        %1174 = vmatprep.subr.bf16.mxu0 0
        %1175 = vmatpush1.bf16.msra.mxu0 0
        %1176 = vmatprep.subr.bf16.mxu0 0
        %1177 = vmatpush1.bf16.msra.mxu0 0
        %1178 = vmatprep.subr.bf16.mxu0 0
        %1179 = vmatpush1.bf16.msra.mxu0 0
        %1180 = vmatprep.subr.bf16.mxu0 0
        %1181 = vmatpush1.bf16.msra.mxu0 0
        %1182 = vmatprep.subr.bf16.mxu0 0
        %1183 = vmatpush1.bf16.msra.mxu0 0
        %1184 = vmatprep.subr.bf16.mxu0 0
        %1185 = vmatpush1.bf16.msra.mxu0 %v1127
        %1186 = vmatprep.subr.bf16.mxu0 0
        %1187 = vmatpush2.bf16.msra.mxu0 0
        %1188 = vmatprep.subr.bf16.mxu0 0
        %1189 = vmatpush2.bf16.msra.mxu0 0
        %1190 = vmatprep.subr.bf16.mxu0 0
        %1191 = vmatpush2.bf16.msra.mxu0 0
        %1192 = vmatprep.subr.bf16.mxu0 0
        %1193 = vmatpush2.bf16.msra.mxu0 0
        %1194 = vmatprep.subr.bf16.mxu0 0
        %1195 = vmatpush2.bf16.msra.mxu0 0
        %1196 = vmatprep.subr.bf16.mxu0 0
        %1197 = vmatpush2.bf16.msra.mxu0 0
        %1198 = vmatprep.subr.bf16.mxu0 0
        %1199 = vmatpush2.bf16.msra.mxu0 0
        %1200 = vmatprep.subr.bf16.mxu0 0
        %1201 = vmatpush2.bf16.msra.mxu0 0
        %1202 = vmatprep.mubr.bf16.mxu0 0
        %1203 = vmatmul.mubr.bf16.gmra.mxu0 %v1118
        %v1204 = vpop.f32.mrf.mxu0
        %v1205 = vadd.f32 0.0, %v1204
        %v1206 = vpop.f32.mrf.mxu0
        %v1207 = vpop.f32.mrf.mxu0
        %v1208 = vpop.f32.mrf.mxu0
        %1209 = vdwg.mxu0
        %v1210 = vadd.f32 %v1085, %v1164
        %v1211 = vadd.f32 %v1086, %v1166
        %v1212 = vadd.f32 %v1087, %v1205
        %v1213 = vld [vmem:[%s235] sm:$0x3f]
        %s1214 = scalar_lea.vmem %s1, 32
        %v1215 = vld [vmem:[%s1214] sm:$0xf]
        %v1217 = vcombine.high %v1213, %v1213
        %v1219 = vunpack.c.l.s4 1983009808
        %v1220 = vunpack.c.0.s8 %v1219
        %v1221 = vlaneseq
        %v1222 = vshrl.u32 %v1221, 7
        %v1223 = vsub.s32 %v1220, %v1222
        %v1224 = vrot.slane %v1213, %v1223
        %v1226 = vunpack.c.l.s4 1983009808
        %v1227 = vunpack.c.0.s8 %v1226
        %v1228 = vlaneseq
        %v1229 = vshrl.u32 %v1228, 7
        %v1230 = vsub.s32 %v1227, %v1229
        %v1231 = vrot.slane %v1217, %v1230
        %v1232 = vcombine.high %v1224, %v1224
        %1233 = vrot.lane.b32.xlu0 %v1224, 90
        %v1234 = vpop.permute.xlu0 %1233
        %1235 = vrot.lane.b32.xlu0 %v1232, 90
        %v1236 = vpop.permute.xlu0 %1235
        %1237 = vrot.lane.b32.xlu0 %v1231, 90
        %v1238 = vpop.permute.xlu0 %1237
        %vm1239 = vcmask 736256
        %v1240 = vsel %vm1239, %v1234, %v1236
        %v1241 = vsel %vm1239, %v1236, %v1238
        %v1243 = vsel %vm275, %v1215, 0
        %v1246 = vsel %vm279, %v1240, 0
        %v1249 = vsel %vm279, %v1241, 0
        %v1252 = vsel %vm279, %v1238, 0
        %1254 = vmatprep.subr.bf16.mxu0 0
        %1255 = vmatpush1.bf16.msra.mxu0 0
        %1256 = vmatprep.subr.bf16.mxu0 0
        %1257 = vmatpush1.bf16.msra.mxu0 0
        %1258 = vmatprep.subr.bf16.mxu0 0
        %1259 = vmatpush1.bf16.msra.mxu0 0
        %1260 = vmatprep.subr.bf16.mxu0 0
        %1261 = vmatpush1.bf16.msra.mxu0 0
        %1262 = vmatprep.subr.bf16.mxu0 0
        %1263 = vmatpush1.bf16.msra.mxu0 0
        %1264 = vmatprep.subr.bf16.mxu0 0
        %1265 = vmatpush1.bf16.msra.mxu0 0
        %1266 = vmatprep.subr.bf16.mxu0 0
        %1267 = vmatpush1.bf16.msra.mxu0 0
        %1268 = vmatprep.subr.bf16.mxu0 %v1249
        %1269 = vmatpush1.bf16.msra.mxu0 %v1246
        %1270 = vmatprep.subr.bf16.mxu0 0
        %1271 = vmatpush2.bf16.msra.mxu0 0
        %1272 = vmatprep.subr.bf16.mxu0 0
        %1273 = vmatpush2.bf16.msra.mxu0 0
        %1274 = vmatprep.subr.bf16.mxu0 0
        %1275 = vmatpush2.bf16.msra.mxu0 0
        %1276 = vmatprep.subr.bf16.mxu0 0
        %1277 = vmatpush2.bf16.msra.mxu0 0
        %1278 = vmatprep.subr.bf16.mxu0 0
        %1279 = vmatpush2.bf16.msra.mxu0 0
        %1280 = vmatprep.subr.bf16.mxu0 0
        %1281 = vmatpush2.bf16.msra.mxu0 0
        %1282 = vmatprep.subr.bf16.mxu0 0
        %1283 = vmatpush2.bf16.msra.mxu0 0
        %1284 = vmatprep.subr.bf16.mxu0 0
        %1285 = vmatpush2.bf16.msra.mxu0 0
        %1286 = vmatprep.mubr.bf16.mxu0 0
        %1287 = vmatmul.mubr.bf16.gmra.mxu0 %v1243
        %v1288 = vpop.f32.mrf.mxu0
        %v1289 = vadd.f32 0.0, %v1288
        %v1290 = vpop.f32.mrf.mxu0
        %v1291 = vadd.f32 0.0, %v1290
        %v1292 = vpop.f32.mrf.mxu0
        %v1293 = vpop.f32.mrf.mxu0
        %1294 = vdwg.mxu0
        %1295 = vmatprep.subr.bf16.mxu0 0
        %1296 = vmatpush1.bf16.msra.mxu0 0
        %1297 = vmatprep.subr.bf16.mxu0 0
        %1298 = vmatpush1.bf16.msra.mxu0 0
        %1299 = vmatprep.subr.bf16.mxu0 0
        %1300 = vmatpush1.bf16.msra.mxu0 0
        %1301 = vmatprep.subr.bf16.mxu0 0
        %1302 = vmatpush1.bf16.msra.mxu0 0
        %1303 = vmatprep.subr.bf16.mxu0 0
        %1304 = vmatpush1.bf16.msra.mxu0 0
        %1305 = vmatprep.subr.bf16.mxu0 0
        %1306 = vmatpush1.bf16.msra.mxu0 0
        %1307 = vmatprep.subr.bf16.mxu0 0
        %1308 = vmatpush1.bf16.msra.mxu0 0
        %1309 = vmatprep.subr.bf16.mxu0 0
        %1310 = vmatpush1.bf16.msra.mxu0 %v1252
        %1311 = vmatprep.subr.bf16.mxu0 0
        %1312 = vmatpush2.bf16.msra.mxu0 0
        %1313 = vmatprep.subr.bf16.mxu0 0
        %1314 = vmatpush2.bf16.msra.mxu0 0
        %1315 = vmatprep.subr.bf16.mxu0 0
        %1316 = vmatpush2.bf16.msra.mxu0 0
        %1317 = vmatprep.subr.bf16.mxu0 0
        %1318 = vmatpush2.bf16.msra.mxu0 0
        %1319 = vmatprep.subr.bf16.mxu0 0
        %1320 = vmatpush2.bf16.msra.mxu0 0
        %1321 = vmatprep.subr.bf16.mxu0 0
        %1322 = vmatpush2.bf16.msra.mxu0 0
        %1323 = vmatprep.subr.bf16.mxu0 0
        %1324 = vmatpush2.bf16.msra.mxu0 0
        %1325 = vmatprep.subr.bf16.mxu0 0
        %1326 = vmatpush2.bf16.msra.mxu0 0
        %1327 = vmatprep.mubr.bf16.mxu0 0
        %1328 = vmatmul.mubr.bf16.gmra.mxu0 %v1243
        %v1329 = vpop.f32.mrf.mxu0
        %v1330 = vadd.f32 0.0, %v1329
        %v1331 = vpop.f32.mrf.mxu0
        %v1332 = vpop.f32.mrf.mxu0
        %v1333 = vpop.f32.mrf.mxu0
        %1334 = vdwg.mxu0
        %v1335 = vadd.f32 %v1210, %v1289
        %v1336 = vadd.f32 %v1211, %v1291
        %v1337 = vadd.f32 %v1212, %v1330
        %v1338 = vpack.c.bf16 %v1335, %v1335
        %v1339 = vpack.c.bf16 %v1336, %v1336
        %v1340 = vpack.c.bf16 %v1337, %v1337
        %v1344 = vunpack.c.l.b16 %v1338
        %v1345 = vunpack.c.l.b16 %v1339
        %v1346 = vunpack.c.l.b16 %v1340
        %v1347 = vpack.c.b16 %v1345, %v1344
        %v1348 = vpack.c.b16 %v1346, %v1346
        %1351 = vst [vmem:[%s218] sm:$0xff] %v1347
        %vm1352 = vcmask 257024
        %1353 = vst.msk [vmem:[%s218 + $0x8] sm:$0xf] %vm1352, %v1348
        %v1354 = vld [vmem:[%s2] sm:$0x7]
        %v1356 = vlaneseq
        %v1357 = vshrl.u32 %v1356, 7
        %v1358 = vsub.s32 0, %v1357
        %v1359 = vrot.slane %v1354, %v1358
        %v1360 = vlaneseq
        %v1361 = vshrl.u32 %v1360, 7
        %v1362 = vsub.s32 1, %v1361
        %v1363 = vrot.slane %v1354, %v1362
        %v1364 = vlaneseq
        %v1365 = vshrl.u32 %v1364, 7
        %v1366 = vsub.s32 2, %v1365
        %v1367 = vrot.slane %v1354, %v1366
        %v1371 = vmul.f32 %v1335, %v1359
        %v1372 = vmul.f32 %v1336, %v1363
        %v1373 = vmul.f32 %v1337, %v1367
        %v1374 = vadd.f32 %v1371, %v1372
        %vm1375 = vcmask 261120
        %v1376 = vsel %vm1375, %v1373, 0.0
        %v1377 = vadd.f32 %v1374, %v1376
        %1378 = vadd.xlane.f32.xlu0 %v1377
        %v1379 = vpop.xlane.xlu0 %1378
        %vm1380 = vcmask 7168
        %1381 = vst.msk [vmem:[%s239] sm:$0xff] %vm1380, %v1379
        %v1382 = vmul.f32 %v1335, %v1371
        %v1383 = vmul.f32 %v1336, %v1372
        %v1384 = vmul.f32 %v1337, %v1373
        %v1385 = vadd.f32 %v1382, %v1383
        %v1386 = vsel %vm1375, %v1384, 0.0
        %v1387 = vadd.f32 %v1385, %v1386
        %1388 = vadd.xlane.f32.xlu0 %v1387
        %v1389 = vpop.xlane.xlu0 %1388
        %1390 = vst.msk [vmem:[%s243] sm:$0xff] %vm1380, %v1389
        %s1391 = sand.u32 %s96, 1
        %s1392 = scalar_lea.sflag [#allocation3], %s1391
        %s1393 = sand.u32 %s96, 1
        %s1394 = smul.addr %s1393, 12
        %s1395 = scalar_lea.vmem [#allocation2], %s1394
        %p1396 = scmp.lt.s32.totalorder %s20, 1
        %s1397 = scalar_select %p1396, %s20, 1
        %s1398 = smul.addr %s1397, 8
        %s1399 = scalar_lea.vmem %s4, %s1398
        %p1400 = scmp.lt.s32.totalorder %s20, 1
        %s1401 = scalar_select %p1400, %s20, 1
        %s1402 = smul.addr %s1401, 8
        %s1403 = scalar_lea.vmem %s5, %s1402
        // Predicated region
        $region33: #{tpu_custom_call.1} parent=31 // pred_check
          %p1404 = pneg %p106
        $region34: #{tpu_custom_call.1} parent=31 // pred_check_branch
          %1406 = sbr.rel (%p1404) target = $region36
        $region35: #{tpu_custom_call.1} parent=31 // pred_region
          %s1408 = ssub.s32 192, 192
          %1409 = vsyncadd %s1392, %s1408
          %s1410 = smul.addr %s20, 3
          %s1411 = smul.addr %s1410, 64
          %s1412 = scalar_lea.hbm %s3, %s1411
          %s1414 = sshll.u32 %s1395, 4
          %s1415 = int_to_ptr.vmem [resolvable:$true] %s1414
          %1417 = dma.vmem_to_hbm [thread:$0]  %s1415, 192, %s1412, %s1392
        $region36: #{tpu_custom_call.1} parent=31 // pred_fallthru
          _
        // Predicated region
        $region37: #{tpu_custom_call.1} parent=31 // pred_check
          %p1418 = pneg %p132
        $region38: #{tpu_custom_call.1} parent=31 // pred_check_branch
          %1420 = sbr.rel (%p1418) target = $region40
        $region39: #{tpu_custom_call.1} parent=31 // pred_region
          _
        $region40: #{tpu_custom_call.1} parent=31 // pred_fallthru
          _
        // Predicated region
        $region41: #{tpu_custom_call.1} parent=31 // pred_check
          %p1421 = pneg %p158
        $region42: #{tpu_custom_call.1} parent=31 // pred_check_branch
          %1423 = sbr.rel (%p1421) target = $region44
        $region43: #{tpu_custom_call.1} parent=31 // pred_region
          _
        $region44: #{tpu_custom_call.1} parent=31 // pred_fallthru
          _
      $region32: #{tpu_custom_call.1} parent=5 // pred_fallthru
        _
      %p1424 = scmp.le.s32.totalorder 2, %s15
      // Predicated region
      $region45: #{tpu_custom_call.1} parent=5 // pred_check
        %p1425 = pneg %p1424
      $region46: #{tpu_custom_call.1} parent=5 // pred_check_branch
        %1427 = sbr.rel (%p1425) target = $region48
      $region47: #{tpu_custom_call.1} parent=5 // pred_region
        %s1428 = ssub.s32 %s15, 2
        // Predicated region
        $region49: #{tpu_custom_call.1} parent=47 // pred_check
          %p1429 = pneg %p112
        $region50: #{tpu_custom_call.1} parent=47 // pred_check_branch
          %1431 = sbr.rel (%p1429) target = $region52
        $region51: #{tpu_custom_call.1} parent=47 // pred_region
          %s1432 = sand.u32 %s97, 1
          %s1433 = scalar_lea.sflag [#allocation3], %s1432
          %s1434 = sand.u32 %s97, 1
          %s1435 = smul.addr %s1434, 12
          %s1436 = scalar_lea.vmem [#allocation2], %s1435
          %1437 = dma.done %s1433, 192
        $region52: #{tpu_custom_call.1} parent=47 // pred_fallthru
          _
        // Predicated region
        $region53: #{tpu_custom_call.1} parent=47 // pred_check
          %p1438 = pneg %p138
        $region54: #{tpu_custom_call.1} parent=47 // pred_check_branch
          %1440 = sbr.rel (%p1438) target = $region56
        $region55: #{tpu_custom_call.1} parent=47 // pred_region
          %p1441 = scmp.lt.s32.totalorder %s21, 1
          %s1442 = scalar_select %p1441, %s21, 1
          %s1443 = smul.addr %s1442, 8
          %s1444 = scalar_lea.vmem %s4, %s1443
        $region56: #{tpu_custom_call.1} parent=47 // pred_fallthru
          _
        // Predicated region
        $region57: #{tpu_custom_call.1} parent=47 // pred_check
          %p1445 = pneg %p164
        $region58: #{tpu_custom_call.1} parent=47 // pred_check_branch
          %1447 = sbr.rel (%p1445) target = $region60
        $region59: #{tpu_custom_call.1} parent=47 // pred_region
          %p1448 = scmp.lt.s32.totalorder %s21, 1
          %s1449 = scalar_select %p1448, %s21, 1
          %s1450 = smul.addr %s1449, 8
          %s1451 = scalar_lea.vmem %s5, %s1450
        $region60: #{tpu_custom_call.1} parent=47 // pred_fallthru
          _
      $region48: #{tpu_custom_call.1} parent=5 // pred_fallthru
        _
    $region6: #{tpu_custom_call.1} parent=1 // loop_footer
      %s19 = sadd.s32 1, %s15
    $region7: #{tpu_custom_call.1} parent=1 // loop_footer_branch
      %14 = sbr.rel target = $region3
    $region8: #{tpu_custom_call.1} parent=1 // loop_exit
      _
    %1452 = vsyncpa [#allocation3], 1
    %s1453 = scalar_lea.sflag [#allocation3], 1
    %1454 = vsyncpa %s1453, 1

</llo_original>
